<compile_context>
chip_gen: v6e
topology: v6e:2x2x1
jax: 0.10.0
libtpu: 0.0.40
codegen_flags: <defaults>
</compile_context>

<pallas_src>
import functools

import jax
import jax.numpy as jnp
from jax.experimental import pallas as pl
from jax.experimental.pallas import tpu as pltpu


def _round_up(x, m):
    return (x + m - 1) // m * m


def _largest_divisor_leq(n, cap):
    for d in range(min(n, cap), 0, -1):
        if n % d == 0:
            return d
    return 1


def _pick_batch_block(bp, cap=128):
    """Largest multiple of 8 that divides bp and is <= cap (fallback: bp)."""
    best = bp
    for d in range(8, min(bp, cap) + 1, 8):
        if bp % d == 0:
            best = d
    return best


def lstm_chunk_kernel(xg_ref, w_hh_ref, w_dec_ref, b_dec_ref, h0_ref, c0_ref,
                      out_ref, hN_ref, cN_ref, h_sc, c_sc, hbuf):
    """One (batch-block, time-chunk) grid step.

    xg_ref   : (Tt, Bb, 4*Hp) precomputed x@w_ih + bias gate inputs (i,f,g,o)
    w_hh_ref : (Hp, 4*Hp)     hidden->gates weights
    w_dec_ref: (Hp, Cp)       decode weights
    b_dec_ref: (1, Cp)        decode bias
    h0_ref   : (Bb, Hp)       initial hidden for this batch block
    c0_ref   : (Bb, Hp)       initial cell
    out_ref  : (Tt, Bb, Cp)   per-step logits for this chunk
    hN_ref   : (Bb, Hp)       final hidden (written on last chunk)
    cN_ref   : (Bb, Hp)       final cell
    h_sc/c_sc: (Bb, Hp)       VMEM carry across T-chunks
    hbuf     : (Tt*Bb, Hp)    VMEM hidden-state buffer for the batched decode
    """
    t_blk = pl.program_id(1)
    Tt, Bb, _ = xg_ref.shape
    Hp = h_sc.shape[1]

    @pl.when(t_blk == 0)
    def _():
        h_sc[...] = h0_ref[...]
        c_sc[...] = c0_ref[...]

    w_hh = w_hh_ref[...]          # hoisted: loaded once per chunk
    h = h_sc[...]
    c = c_sc[...]

    # Fully unrolled recurrence (Tt is small): static indices, LLO-visible.
    for i in range(Tt):
        gates = xg_ref[i] + jnp.dot(h, w_hh, preferred_element_type=jnp.float32)
        i_g = jax.nn.sigmoid(gates[:, 0 * Hp:1 * Hp])   # lane-aligned gate slabs
        f_g = jax.nn.sigmoid(gates[:, 1 * Hp:2 * Hp])
        g_g = jnp.tanh(gates[:, 2 * Hp:3 * Hp])
        o_g = jax.nn.sigmoid(gates[:, 3 * Hp:4 * Hp])
        c = f_g * c + i_g * g_g
        h = o_g * jnp.tanh(c)
        hbuf[i * Bb:(i + 1) * Bb, :] = h                # lane-dense Hp-wide store

    h_sc[...] = h
    c_sc[...] = c

    # Batched decode for the whole chunk: one well-shaped MXU matmul,
    # off the serial recurrence path.
    dec = (jnp.dot(hbuf[...], w_dec_ref[...],
                   preferred_element_type=jnp.float32) + b_dec_ref[...])
    for i in range(Tt):
        out_ref[i] = dec[i * Bb:(i + 1) * Bb, :]        # full-lane (Bb, Cp) stores

    @pl.when(t_blk == pl.num_programs(1) - 1)
    def _():
        hN_ref[...] = h
        cN_ref[...] = c


@functools.partial(jax.jit, static_argnames=("t_chunk",))
def charseq_rnn_forward(inp_ids, hidden, params, t_chunk=None):
    """Mirrors CharSeqRNN.forward.

    inp_ids : (B, T) int32 token indices
    hidden  : (h0, c0), each (1, B, H)
    Returns (logits (B, T, C), (hN (1, B, H), cN (1, B, H)))
    """
    emb = params["embed"]          # (C, E)
    w_ih = params["w_ih"]          # (E, 4H)
    w_hh = params["w_hh"]          # (H, 4H)
    b = params["b"]                # (1, 4H)  (= b_ih + b_hh)
    w_dec = params["w_dec"]        # (H, C)
    b_dec = params["b_dec"]        # (1, C)

    h0, c0 = hidden
    B, T = inp_ids.shape
    E = emb.shape[1]
    H = w_hh.shape[0]
    C = w_dec.shape[1]

    Hp = _round_up(H, 128)         # per-gate lane-aligned slab
    Cp = _round_up(C, 128)         # lane-dense logits store
    Bp = _round_up(B, 8)           # f32 sublane
    dH, dC, dB = Hp - H, Cp - C, Bp - B

    # Per-gate zero padding (gate order i, f, g, o).  Zero pads are exact:
    # padded hidden units stay 0 and contribute nothing.
    w_ih_p = jnp.pad(w_ih.reshape(E, 4, H),
                     ((0, 0), (0, 0), (0, dH))).reshape(E, 4 * Hp)
    b_p = jnp.pad(b.reshape(1, 4, H),
                  ((0, 0), (0, 0), (0, dH))).reshape(1, 4 * Hp)
    w_hh_p = jnp.pad(w_hh.reshape(H, 4, H),
                     ((0, dH), (0, 0), (0, dH))).reshape(Hp, 4 * Hp)
    w_dec_p = jnp.pad(w_dec, ((0, dH), (0, dC)))
    b_dec_p = jnp.pad(b_dec, ((0, 0), (0, dC)))

    # Fold embedding lookup + input projection + bias into one gate table and
    # gather directly in time-major: no (T,B,E) tensor, no per-step E-matmul,
    # no HBM-level activation transpose.
    gate_table = jnp.dot(emb, w_ih_p, preferred_element_type=jnp.float32) + b_p
    ids_tm = jnp.pad(jnp.transpose(inp_ids), ((0, 0), (0, dB)))   # (T, Bp)
    x_gates = jnp.take(gate_table, ids_tm, axis=0)                # (T, Bp, 4Hp)

    h0_p = jnp.pad(h0[0], ((0, dB), (0, dH)))
    c0_p = jnp.pad(c0[0], ((0, dB), (0, dH)))

    if t_chunk is None:
        t_chunk = _largest_divisor_leq(T, 16)
    Tt = t_chunk
    assert T % Tt == 0, "t_chunk must divide T"
    Bb = _pick_batch_block(Bp)
    nb, nt = Bp // Bb, T // Tt

    out_p, hN_p, cN_p = pl.pallas_call(
        lstm_chunk_kernel,
        out_shape=(
            jax.ShapeDtypeStruct((T, Bp, Cp), jnp.float32),
            jax.ShapeDtypeStruct((Bp, Hp), jnp.float32),
            jax.ShapeDtypeStruct((Bp, Hp), jnp.float32),
        ),
        grid_spec=pltpu.PrefetchScalarGridSpec(
            num_scalar_prefetch=0,
            grid=(nb, nt),
            in_specs=[
                pl.BlockSpec((Tt, Bb, 4 * Hp), lambda bi, ti: (ti, bi, 0)),
                pl.BlockSpec((Hp, 4 * Hp), lambda bi, ti: (0, 0)),
                pl.BlockSpec((Hp, Cp), lambda bi, ti: (0, 0)),
                pl.BlockSpec((1, Cp), lambda bi, ti: (0, 0)),
                pl.BlockSpec((Bb, Hp), lambda bi, ti: (bi, 0)),
                pl.BlockSpec((Bb, Hp), lambda bi, ti: (bi, 0)),
            ],
            out_specs=(
                pl.BlockSpec((Tt, Bb, Cp), lambda bi, ti: (ti, bi, 0)),
                pl.BlockSpec((Bb, Hp), lambda bi, ti: (bi, 0)),
                pl.BlockSpec((Bb, Hp), lambda bi, ti: (bi, 0)),
            ),
            scratch_shapes=[
                pltpu.VMEM((Bb, Hp), jnp.float32),      # h carry
                pltpu.VMEM((Bb, Hp), jnp.float32),      # c carry
                pltpu.VMEM((Tt * Bb, Hp), jnp.float32),  # hidden buffer for decode
            ],
        ),
        compiler_params=pltpu.CompilerParams(
            dimension_semantics=("parallel", "arbitrary")),
    )(x_gates, w_hh_p, w_dec_p, b_dec_p, h0_p, c0_p)

    logits = jnp.transpose(out_p[:, :B, :C], (1, 0, 2))   # back to batch_first
    return logits, (hN_p[:B, :H][None], cN_p[:B, :H][None])


def init_params(key, num_chars, embed_dim, hidden_dim):
    """Deterministic synthetic parameters (PyTorch gate order i, f, g, o)."""
    ks = jax.random.split(key, 7)
    scale = 1.0 / jnp.sqrt(hidden_dim)
    return {
        "embed": jax.random.normal(ks[0], (num_chars, embed_dim), jnp.float32),
        "w_ih": (jax.random.uniform(ks[1], (embed_dim, 4 * hidden_dim),
                                    jnp.float32, -1.0, 1.0) * scale),
        "w_hh": (jax.random.uniform(ks[2], (hidden_dim, 4 * hidden_dim),
                                    jnp.float32, -1.0, 1.0) * scale),
        "b": (jax.random.uniform(ks[3], (1, 4 * hidden_dim),
                                 jnp.float32, -1.0, 1.0) * scale
              + jax.random.uniform(ks[4], (1, 4 * hidden_dim),
                                   jnp.float32, -1.0, 1.0) * scale),
        "w_dec": (jax.random.uniform(ks[5], (hidden_dim, num_chars),
                                     jnp.float32, -1.0, 1.0) * scale),
        "b_dec": (jax.random.uniform(ks[6], (1, num_chars),
                                     jnp.float32, -1.0, 1.0) * scale),
    }


def reference_forward(inp_ids, hidden, params):
    """Pure-JAX reference matching torch.nn.LSTM semantics (gate order i,f,g,o)."""
    emb, w_ih, w_hh, b = params["embed"], params["w_ih"], params["w_hh"], params["b"]
    w_dec, b_dec = params["w_dec"], params["b_dec"]
    h, c = hidden[0][0], hidden[1][0]
    H = h.shape[1]
    x = jnp.take(emb, inp_ids, axis=0)  # (B, T, E)
    outs = []
    for t in range(inp_ids.shape[1]):
        g = x[:, t, :] @ w_ih + h @ w_hh + b
        i_g = jax.nn.sigmoid(g[:, 0 * H:1 * H])
        f_g = jax.nn.sigmoid(g[:, 1 * H:2 * H])
        g_g = jnp.tanh(g[:, 2 * H:3 * H])
        o_g = jax.nn.sigmoid(g[:, 3 * H:4 * H])
        c = f_g * c + i_g * g_g
        h = o_g * jnp.tanh(c)
        outs.append(h @ w_dec + b_dec)
    return jnp.stack(outs, axis=1), (h[None], c[None])


if __name__ == "__main__":
    num_chars, embed_dim, hidden_dim = 16, 32, 32
    batch, seq = 2, 8

    key = jax.random.PRNGKey(0)
    pkey, ikey = jax.random.split(key)
    params = init_params(pkey, num_chars, embed_dim, hidden_dim)

    inp = jax.random.randint(ikey, (batch, seq), 0, num_chars, dtype=jnp.int32)
    # init_hidden
    hidden = (jnp.zeros((1, batch, hidden_dim), jnp.float32),
              jnp.zeros((1, batch, hidden_dim), jnp.float32))

    # t_chunk=4 -> 2 time-chunks, so the grid + VMEM h/c carry path is exercised.
    logits, (hN, cN) = charseq_rnn_forward(inp, hidden, params, t_chunk=4)
    jax.block_until_ready((logits, hN, cN))

    ref_logits, (ref_h, ref_c) = reference_forward(inp, hidden, params)
    assert logits.shape == (batch, seq, num_chars)
    assert hN.shape == (1, batch, hidden_dim) and cN.shape == (1, batch, hidden_dim)
    assert jnp.allclose(logits, ref_logits, atol=1e-4, rtol=1e-4)
    assert jnp.allclose(hN, ref_h, atol=1e-4, rtol=1e-4)
    assert jnp.allclose(cN, ref_c, atol=1e-4, rtol=1e-4)

    print("KERNEL_OK")
</pallas_src>

<mosaic_0001>
module attributes {stable_mosaic.version = 11 : i64} {
  func.func @lstm_chunk_kernel(%arg0: i32, %arg1: i32, %arg2: memref<4x8x512xf32, #tpu.memory_space<vmem>>, %arg3: memref<128x512xf32, #tpu.memory_space<vmem>>, %arg4: memref<128x128xf32, #tpu.memory_space<vmem>>, %arg5: memref<1x128xf32, #tpu.memory_space<vmem>>, %arg6: memref<8x128xf32, #tpu.memory_space<vmem>>, %arg7: memref<8x128xf32, #tpu.memory_space<vmem>>, %arg8: memref<4x8x128xf32, #tpu.memory_space<vmem>>, %arg9: memref<8x128xf32, #tpu.memory_space<vmem>>, %arg10: memref<8x128xf32, #tpu.memory_space<vmem>>, %arg11: memref<8x128xf32, #tpu.memory_space<vmem>>, %arg12: memref<8x128xf32, #tpu.memory_space<vmem>>, %arg13: memref<32x128xf32, #tpu.memory_space<vmem>>) attributes {dimension_semantics = [#tpu.dimension_semantics<parallel>, #tpu.dimension_semantics<arbitrary>], iteration_bounds = array<i64: 1, 2>, scalar_prefetch = 0 : i64, scratch_operands = 3 : i64, tpu.core_type = #tpu.core_type<tc>, window_params = [{transform_indices = @transform_0, window_bounds = array<i64: 4, 8, 512>}, {pipeline_mode = #tpu.pipeline_mode<synchronous>, transform_indices = @transform_1, window_bounds = array<i64: 128, 512>}, {pipeline_mode = #tpu.pipeline_mode<synchronous>, transform_indices = @transform_2, window_bounds = array<i64: 128, 128>}, {pipeline_mode = #tpu.pipeline_mode<synchronous>, transform_indices = @transform_3, window_bounds = array<i64: 1, 128>}, {transform_indices = @transform_4, window_bounds = array<i64: 8, 128>}, {transform_indices = @transform_5, window_bounds = array<i64: 8, 128>}, {transform_indices = @transform_6, window_bounds = array<i64: 4, 8, 128>}, {transform_indices = @transform_7, window_bounds = array<i64: 8, 128>}, {transform_indices = @transform_8, window_bounds = array<i64: 8, 128>}]} {
    %c0_i32 = arith.constant 0 : i32
    %0 = arith.cmpi eq, %arg1, %c0_i32 : i32
    %1 = arith.extui %0 : i1 to i32
    %c0_i32_0 = arith.constant 0 : i32
    %2 = arith.cmpi ne, %1, %c0_i32_0 : i32
    scf.if %2 {
      %c0_59 = arith.constant 0 : index
      %c0_60 = arith.constant 0 : index
      %153 = vector.load %arg6[%c0_59, %c0_60] : memref<8x128xf32, #tpu.memory_space<vmem>>, vector<8x128xf32>
      %c0_61 = arith.constant 0 : index
      %c0_62 = arith.constant 0 : index
      %154 = vector.load %arg11[%c0_61, %c0_62] : memref<8x128xf32, #tpu.memory_space<vmem>>, vector<8x128xf32>
      tpu.vector_store %arg11[%c0_61, %c0_62], %153 {strides = array<i32>} : memref<8x128xf32, #tpu.memory_space<vmem>>, vector<8x128xf32>,
      %c0_63 = arith.constant 0 : index
      %c0_64 = arith.constant 0 : index
      %155 = vector.load %arg7[%c0_63, %c0_64] : memref<8x128xf32, #tpu.memory_space<vmem>>, vector<8x128xf32>
      %c0_65 = arith.constant 0 : index
      %c0_66 = arith.constant 0 : index
      %156 = vector.load %arg12[%c0_65, %c0_66] : memref<8x128xf32, #tpu.memory_space<vmem>>, vector<8x128xf32>
      tpu.vector_store %arg12[%c0_65, %c0_66], %155 {strides = array<i32>} : memref<8x128xf32, #tpu.memory_space<vmem>>, vector<8x128xf32>,
    } else {
    }
    %c0 = arith.constant 0 : index
    %c0_1 = arith.constant 0 : index
    %3 = vector.load %arg3[%c0, %c0_1] : memref<128x512xf32, #tpu.memory_space<vmem>>, vector<128x512xf32>
    %c0_2 = arith.constant 0 : index
    %c0_3 = arith.constant 0 : index
    %4 = vector.load %arg11[%c0_2, %c0_3] : memref<8x128xf32, #tpu.memory_space<vmem>>, vector<8x128xf32>
    %c0_4 = arith.constant 0 : index
    %c0_5 = arith.constant 0 : index
    %5 = vector.load %arg12[%c0_4, %c0_5] : memref<8x128xf32, #tpu.memory_space<vmem>>, vector<8x128xf32>
    %c0_6 = arith.constant 0 : index
    %c0_7 = arith.constant 0 : index
    %c0_8 = arith.constant 0 : index
    %6 = vector.load %arg2[%c0_6, %c0_7, %c0_8] : memref<4x8x512xf32, #tpu.memory_space<vmem>>, vector<1x8x512xf32>
    %7 = vector.shape_cast %6 : vector<1x8x512xf32> to vector<8x512xf32>
    %cst = arith.constant dense<0.000000e+00> : vector<8x512xf32>
    %8 = tpu.matmul %4, %3, %cst {dimension_numbers = #tpu.dot_dimension_numbers<[1], [0], [0], [1], [0, 0, 1, 1], [], []>} : vector<8x128xf32>, vector<128x512xf32>, vector<8x512xf32> -> vector<8x512xf32>
    %9 = arith.addf %7, %8 : vector<8x512xf32>
    %10 = vector.extract_strided_slice %9 {offsets = [0, 0], sizes = [8, 128], strides = [1, 1]} : vector<8x512xf32> to vector<8x128xf32>
    %11 = arith.negf %10 : vector<8x128xf32>
    %12 = math.exp %11 : vector<8x128xf32>
    %cst_9 = arith.constant 1.000000e+00 : f32
    %13 = vector.broadcast %cst_9 : f32 to vector<8x128xf32>
    %14 = arith.addf %13, %12 : vector<8x128xf32>
    %15 = arith.divf %13, %14 : vector<8x128xf32>
    %16 = vector.extract_strided_slice %9 {offsets = [0, 128], sizes = [8, 128], strides = [1, 1]} : vector<8x512xf32> to vector<8x128xf32>
    %17 = arith.negf %16 : vector<8x128xf32>
    %18 = math.exp %17 : vector<8x128xf32>
    %cst_10 = arith.constant 1.000000e+00 : f32
    %19 = vector.broadcast %cst_10 : f32 to vector<8x128xf32>
    %20 = arith.addf %19, %18 : vector<8x128xf32>
    %21 = arith.divf %19, %20 : vector<8x128xf32>
    %22 = vector.extract_strided_slice %9 {offsets = [0, 256], sizes = [8, 128], strides = [1, 1]} : vector<8x512xf32> to vector<8x128xf32>
    %23 = math.tanh %22 : vector<8x128xf32>
    %24 = vector.extract_strided_slice %9 {offsets = [0, 384], sizes = [8, 128], strides = [1, 1]} : vector<8x512xf32> to vector<8x128xf32>
    %25 = arith.negf %24 : vector<8x128xf32>
    %26 = math.exp %25 : vector<8x128xf32>
    %cst_11 = arith.constant 1.000000e+00 : f32
    %27 = vector.broadcast %cst_11 : f32 to vector<8x128xf32>
    %28 = arith.addf %27, %26 : vector<8x128xf32>
    %29 = arith.divf %27, %28 : vector<8x128xf32>
    %30 = arith.mulf %21, %5 : vector<8x128xf32>
    %31 = arith.mulf %15, %23 : vector<8x128xf32>
    %32 = arith.addf %30, %31 : vector<8x128xf32>
    %33 = math.tanh %32 : vector<8x128xf32>
    %34 = arith.mulf %29, %33 : vector<8x128xf32>
    %c0_12 = arith.constant 0 : index
    %c0_13 = arith.constant 0 : index
    %35 = vector.load %arg13[%c0_12, %c0_13] : memref<32x128xf32, #tpu.memory_space<vmem>>, vector<8x128xf32>
    tpu.vector_store %arg13[%c0_12, %c0_13], %34 {strides = array<i32>} : memref<32x128xf32, #tpu.memory_space<vmem>>, vector<8x128xf32>,
    %c1 = arith.constant 1 : index
    %c0_14 = arith.constant 0 : index
    %c0_15 = arith.constant 0 : index
    %36 = vector.load %arg2[%c1, %c0_14, %c0_15] : memref<4x8x512xf32, #tpu.memory_space<vmem>>, vector<1x8x512xf32>
    %37 = vector.shape_cast %36 : vector<1x8x512xf32> to vector<8x512xf32>
    %cst_16 = arith.constant dense<0.000000e+00> : vector<8x512xf32>
    %38 = tpu.matmul %34, %3, %cst_16 {dimension_numbers = #tpu.dot_dimension_numbers<[1], [0], [0], [1], [0, 0, 1, 1], [], []>} : vector<8x128xf32>, vector<128x512xf32>, vector<8x512xf32> -> vector<8x512xf32>
    %39 = arith.addf %37, %38 : vector<8x512xf32>
    %40 = vector.extract_strided_slice %39 {offsets = [0, 0], sizes = [8, 128], strides = [1, 1]} : vector<8x512xf32> to vector<8x128xf32>
    %41 = arith.negf %40 : vector<8x128xf32>
    %42 = math.exp %41 : vector<8x128xf32>
    %cst_17 = arith.constant 1.000000e+00 : f32
    %43 = vector.broadcast %cst_17 : f32 to vector<8x128xf32>
    %44 = arith.addf %43, %42 : vector<8x128xf32>
    %45 = arith.divf %43, %44 : vector<8x128xf32>
    %46 = vector.extract_strided_slice %39 {offsets = [0, 128], sizes = [8, 128], strides = [1, 1]} : vector<8x512xf32> to vector<8x128xf32>
    %47 = arith.negf %46 : vector<8x128xf32>
    %48 = math.exp %47 : vector<8x128xf32>
    %cst_18 = arith.constant 1.000000e+00 : f32
    %49 = vector.broadcast %cst_18 : f32 to vector<8x128xf32>
    %50 = arith.addf %49, %48 : vector<8x128xf32>
    %51 = arith.divf %49, %50 : vector<8x128xf32>
    %52 = vector.extract_strided_slice %39 {offsets = [0, 256], sizes = [8, 128], strides = [1, 1]} : vector<8x512xf32> to vector<8x128xf32>
    %53 = math.tanh %52 : vector<8x128xf32>
    %54 = vector.extract_strided_slice %39 {offsets = [0, 384], sizes = [8, 128], strides = [1, 1]} : vector<8x512xf32> to vector<8x128xf32>
    %55 = arith.negf %54 : vector<8x128xf32>
    %56 = math.exp %55 : vector<8x128xf32>
    %cst_19 = arith.constant 1.000000e+00 : f32
    %57 = vector.broadcast %cst_19 : f32 to vector<8x128xf32>
    %58 = arith.addf %57, %56 : vector<8x128xf32>
    %59 = arith.divf %57, %58 : vector<8x128xf32>
    %60 = arith.mulf %51, %32 : vector<8x128xf32>
    %61 = arith.mulf %45, %53 : vector<8x128xf32>
    %62 = arith.addf %60, %61 : vector<8x128xf32>
    %63 = math.tanh %62 : vector<8x128xf32>
    %64 = arith.mulf %59, %63 : vector<8x128xf32>
    %c8 = arith.constant 8 : index
    %c0_20 = arith.constant 0 : index
    %65 = vector.load %arg13[%c8, %c0_20] : memref<32x128xf32, #tpu.memory_space<vmem>>, vector<8x128xf32>
    tpu.vector_store %arg13[%c8, %c0_20], %64 {strides = array<i32>} : memref<32x128xf32, #tpu.memory_space<vmem>>, vector<8x128xf32>,
    %c2 = arith.constant 2 : index
    %c0_21 = arith.constant 0 : index
    %c0_22 = arith.constant 0 : index
    %66 = vector.load %arg2[%c2, %c0_21, %c0_22] : memref<4x8x512xf32, #tpu.memory_space<vmem>>, vector<1x8x512xf32>
    %67 = vector.shape_cast %66 : vector<1x8x512xf32> to vector<8x512xf32>
    %cst_23 = arith.constant dense<0.000000e+00> : vector<8x512xf32>
    %68 = tpu.matmul %64, %3, %cst_23 {dimension_numbers = #tpu.dot_dimension_numbers<[1], [0], [0], [1], [0, 0, 1, 1], [], []>} : vector<8x128xf32>, vector<128x512xf32>, vector<8x512xf32> -> vector<8x512xf32>
    %69 = arith.addf %67, %68 : vector<8x512xf32>
    %70 = vector.extract_strided_slice %69 {offsets = [0, 0], sizes = [8, 128], strides = [1, 1]} : vector<8x512xf32> to vector<8x128xf32>
    %71 = arith.negf %70 : vector<8x128xf32>
    %72 = math.exp %71 : vector<8x128xf32>
    %cst_24 = arith.constant 1.000000e+00 : f32
    %73 = vector.broadcast %cst_24 : f32 to vector<8x128xf32>
    %74 = arith.addf %73, %72 : vector<8x128xf32>
    %75 = arith.divf %73, %74 : vector<8x128xf32>
    %76 = vector.extract_strided_slice %69 {offsets = [0, 128], sizes = [8, 128], strides = [1, 1]} : vector<8x512xf32> to vector<8x128xf32>
    %77 = arith.negf %76 : vector<8x128xf32>
    %78 = math.exp %77 : vector<8x128xf32>
    %cst_25 = arith.constant 1.000000e+00 : f32
    %79 = vector.broadcast %cst_25 : f32 to vector<8x128xf32>
    %80 = arith.addf %79, %78 : vector<8x128xf32>
    %81 = arith.divf %79, %80 : vector<8x128xf32>
    %82 = vector.extract_strided_slice %69 {offsets = [0, 256], sizes = [8, 128], strides = [1, 1]} : vector<8x512xf32> to vector<8x128xf32>
    %83 = math.tanh %82 : vector<8x128xf32>
    %84 = vector.extract_strided_slice %69 {offsets = [0, 384], sizes = [8, 128], strides = [1, 1]} : vector<8x512xf32> to vector<8x128xf32>
    %85 = arith.negf %84 : vector<8x128xf32>
    %86 = math.exp %85 : vector<8x128xf32>
    %cst_26 = arith.constant 1.000000e+00 : f32
    %87 = vector.broadcast %cst_26 : f32 to vector<8x128xf32>
    %88 = arith.addf %87, %86 : vector<8x128xf32>
    %89 = arith.divf %87, %88 : vector<8x128xf32>
    %90 = arith.mulf %81, %62 : vector<8x128xf32>
    %91 = arith.mulf %75, %83 : vector<8x128xf32>
    %92 = arith.addf %90, %91 : vector<8x128xf32>
    %93 = math.tanh %92 : vector<8x128xf32>
    %94 = arith.mulf %89, %93 : vector<8x128xf32>
    %c16 = arith.constant 16 : index
    %c0_27 = arith.constant 0 : index
    %95 = vector.load %arg13[%c16, %c0_27] : memref<32x128xf32, #tpu.memory_space<vmem>>, vector<8x128xf32>
    tpu.vector_store %arg13[%c16, %c0_27], %94 {strides = array<i32>} : memref<32x128xf32, #tpu.memory_space<vmem>>, vector<8x128xf32>,
    %c3 = arith.constant 3 : index
    %c0_28 = arith.constant 0 : index
    %c0_29 = arith.constant 0 : index
    %96 = vector.load %arg2[%c3, %c0_28, %c0_29] : memref<4x8x512xf32, #tpu.memory_space<vmem>>, vector<1x8x512xf32>
    %97 = vector.shape_cast %96 : vector<1x8x512xf32> to vector<8x512xf32>
    %cst_30 = arith.constant dense<0.000000e+00> : vector<8x512xf32>
    %98 = tpu.matmul %94, %3, %cst_30 {dimension_numbers = #tpu.dot_dimension_numbers<[1], [0], [0], [1], [0, 0, 1, 1], [], []>} : vector<8x128xf32>, vector<128x512xf32>, vector<8x512xf32> -> vector<8x512xf32>
    %99 = arith.addf %97, %98 : vector<8x512xf32>
    %100 = vector.extract_strided_slice %99 {offsets = [0, 0], sizes = [8, 128], strides = [1, 1]} : vector<8x512xf32> to vector<8x128xf32>
    %101 = arith.negf %100 : vector<8x128xf32>
    %102 = math.exp %101 : vector<8x128xf32>
    %cst_31 = arith.constant 1.000000e+00 : f32
    %103 = vector.broadcast %cst_31 : f32 to vector<8x128xf32>
    %104 = arith.addf %103, %102 : vector<8x128xf32>
    %105 = arith.divf %103, %104 : vector<8x128xf32>
    %106 = vector.extract_strided_slice %99 {offsets = [0, 128], sizes = [8, 128], strides = [1, 1]} : vector<8x512xf32> to vector<8x128xf32>
    %107 = arith.negf %106 : vector<8x128xf32>
    %108 = math.exp %107 : vector<8x128xf32>
    %cst_32 = arith.constant 1.000000e+00 : f32
    %109 = vector.broadcast %cst_32 : f32 to vector<8x128xf32>
    %110 = arith.addf %109, %108 : vector<8x128xf32>
    %111 = arith.divf %109, %110 : vector<8x128xf32>
    %112 = vector.extract_strided_slice %99 {offsets = [0, 256], sizes = [8, 128], strides = [1, 1]} : vector<8x512xf32> to vector<8x128xf32>
    %113 = math.tanh %112 : vector<8x128xf32>
    %114 = vector.extract_strided_slice %99 {offsets = [0, 384], sizes = [8, 128], strides = [1, 1]} : vector<8x512xf32> to vector<8x128xf32>
    %115 = arith.negf %114 : vector<8x128xf32>
    %116 = math.exp %115 : vector<8x128xf32>
    %cst_33 = arith.constant 1.000000e+00 : f32
    %117 = vector.broadcast %cst_33 : f32 to vector<8x128xf32>
    %118 = arith.addf %117, %116 : vector<8x128xf32>
    %119 = arith.divf %117, %118 : vector<8x128xf32>
    %120 = arith.mulf %111, %92 : vector<8x128xf32>
    %121 = arith.mulf %105, %113 : vector<8x128xf32>
    %122 = arith.addf %120, %121 : vector<8x128xf32>
    %123 = math.tanh %122 : vector<8x128xf32>
    %124 = arith.mulf %119, %123 : vector<8x128xf32>
    %c24 = arith.constant 24 : index
    %c0_34 = arith.constant 0 : index
    %125 = vector.load %arg13[%c24, %c0_34] : memref<32x128xf32, #tpu.memory_space<vmem>>, vector<8x128xf32>
    tpu.vector_store %arg13[%c24, %c0_34], %124 {strides = array<i32>} : memref<32x128xf32, #tpu.memory_space<vmem>>, vector<8x128xf32>,
    %c0_35 = arith.constant 0 : index
    %c0_36 = arith.constant 0 : index
    %126 = vector.load %arg11[%c0_35, %c0_36] : memref<8x128xf32, #tpu.memory_space<vmem>>, vector<8x128xf32>
    tpu.vector_store %arg11[%c0_35, %c0_36], %124 {strides = array<i32>} : memref<8x128xf32, #tpu.memory_space<vmem>>, vector<8x128xf32>,
    %c0_37 = arith.constant 0 : index
    %c0_38 = arith.constant 0 : index
    %127 = vector.load %arg12[%c0_37, %c0_38] : memref<8x128xf32, #tpu.memory_space<vmem>>, vector<8x128xf32>
    tpu.vector_store %arg12[%c0_37, %c0_38], %122 {strides = array<i32>} : memref<8x128xf32, #tpu.memory_space<vmem>>, vector<8x128xf32>,
    %c0_39 = arith.constant 0 : index
    %c0_40 = arith.constant 0 : index
    %128 = vector.load %arg13[%c0_39, %c0_40] : memref<32x128xf32, #tpu.memory_space<vmem>>, vector<32x128xf32>
    %c0_41 = arith.constant 0 : index
    %c0_42 = arith.constant 0 : index
    %129 = vector.load %arg4[%c0_41, %c0_42] : memref<128x128xf32, #tpu.memory_space<vmem>>, vector<128x128xf32>
    %cst_43 = arith.constant dense<0.000000e+00> : vector<32x128xf32>
    %130 = tpu.matmul %128, %129, %cst_43 {dimension_numbers = #tpu.dot_dimension_numbers<[1], [0], [0], [1], [0, 0, 1, 1], [], []>} : vector<32x128xf32>, vector<128x128xf32>, vector<32x128xf32> -> vector<32x128xf32>
    %c0_44 = arith.constant 0 : index
    %c0_45 = arith.constant 0 : index
    %131 = vector.load %arg5[%c0_44, %c0_45] : memref<1x128xf32, #tpu.memory_space<vmem>>, vector<1x128xf32>
    %132 = vector.broadcast %131 : vector<1x128xf32> to vector<32x128xf32>
    %133 = arith.addf %130, %132 : vector<32x128xf32>
    %134 = vector.extract_strided_slice %133 {offsets = [0, 0], sizes = [8, 128], strides = [1, 1]} : vector<32x128xf32> to vector<8x128xf32>
    %c0_46 = arith.constant 0 : index
    %c0_47 = arith.constant 0 : index
    %c0_48 = arith.constant 0 : index
    %135 = vector.load %arg8[%c0_46, %c0_47, %c0_48] : memref<4x8x128xf32, #tpu.memory_space<vmem>>, vector<1x8x128xf32>
    %136 = vector.shape_cast %135 : vector<1x8x128xf32> to vector<8x128xf32>
    %137 = vector.shape_cast %134 : vector<8x128xf32> to vector<1x8x128xf32>
    tpu.vector_store %arg8[%c0_46, %c0_47, %c0_48], %137 {strides = array<i32>} : memref<4x8x128xf32, #tpu.memory_space<vmem>>, vector<1x8x128xf32>,
    %138 = vector.extract_strided_slice %133 {offsets = [8, 0], sizes = [8, 128], strides = [1, 1]} : vector<32x128xf32> to vector<8x128xf32>
    %c1_49 = arith.constant 1 : index
    %c0_50 = arith.constant 0 : index
    %c0_51 = arith.constant 0 : index
    %139 = vector.load %arg8[%c1_49, %c0_50, %c0_51] : memref<4x8x128xf32, #tpu.memory_space<vmem>>, vector<1x8x128xf32>
    %140 = vector.shape_cast %139 : vector<1x8x128xf32> to vector<8x128xf32>
    %141 = vector.shape_cast %138 : vector<8x128xf32> to vector<1x8x128xf32>
    tpu.vector_store %arg8[%c1_49, %c0_50, %c0_51], %141 {strides = array<i32>} : memref<4x8x128xf32, #tpu.memory_space<vmem>>, vector<1x8x128xf32>,
    %142 = vector.extract_strided_slice %133 {offsets = [16, 0], sizes = [8, 128], strides = [1, 1]} : vector<32x128xf32> to vector<8x128xf32>
    %c2_52 = arith.constant 2 : index
    %c0_53 = arith.constant 0 : index
    %c0_54 = arith.constant 0 : index
    %143 = vector.load %arg8[%c2_52, %c0_53, %c0_54] : memref<4x8x128xf32, #tpu.memory_space<vmem>>, vector<1x8x128xf32>
    %144 = vector.shape_cast %143 : vector<1x8x128xf32> to vector<8x128xf32>
    %145 = vector.shape_cast %142 : vector<8x128xf32> to vector<1x8x128xf32>
    tpu.vector_store %arg8[%c2_52, %c0_53, %c0_54], %145 {strides = array<i32>} : memref<4x8x128xf32, #tpu.memory_space<vmem>>, vector<1x8x128xf32>,
    %146 = vector.extract_strided_slice %133 {offsets = [24, 0], sizes = [8, 128], strides = [1, 1]} : vector<32x128xf32> to vector<8x128xf32>
    %c3_55 = arith.constant 3 : index
    %c0_56 = arith.constant 0 : index
    %c0_57 = arith.constant 0 : index
    %147 = vector.load %arg8[%c3_55, %c0_56, %c0_57] : memref<4x8x128xf32, #tpu.memory_space<vmem>>, vector<1x8x128xf32>
    %148 = vector.shape_cast %147 : vector<1x8x128xf32> to vector<8x128xf32>
    %149 = vector.shape_cast %146 : vector<8x128xf32> to vector<1x8x128xf32>
    tpu.vector_store %arg8[%c3_55, %c0_56, %c0_57], %149 {strides = array<i32>} : memref<4x8x128xf32, #tpu.memory_space<vmem>>, vector<1x8x128xf32>,
    %c1_i32 = arith.constant 1 : i32
    %150 = arith.cmpi eq, %arg1, %c1_i32 : i32
    %151 = arith.extui %150 : i1 to i32
    %c0_i32_58 = arith.constant 0 : i32
    %152 = arith.cmpi ne, %151, %c0_i32_58 : i32
    scf.if %152 {
      %c0_59 = arith.constant 0 : index
      %c0_60 = arith.constant 0 : index
      %153 = vector.load %arg9[%c0_59, %c0_60] : memref<8x128xf32, #tpu.memory_space<vmem>>, vector<8x128xf32>
      tpu.vector_store %arg9[%c0_59, %c0_60], %124 {strides = array<i32>} : memref<8x128xf32, #tpu.memory_space<vmem>>, vector<8x128xf32>,
      %c0_61 = arith.constant 0 : index
      %c0_62 = arith.constant 0 : index
      %154 = vector.load %arg10[%c0_61, %c0_62] : memref<8x128xf32, #tpu.memory_space<vmem>>, vector<8x128xf32>
      tpu.vector_store %arg10[%c0_61, %c0_62], %122 {strides = array<i32>} : memref<8x128xf32, #tpu.memory_space<vmem>>, vector<8x128xf32>,
    } else {
    }
    return
  }
  func.func @transform_0(%arg0: i32, %arg1: i32) -> (i32, i32, i32) {
    %c0_i32 = arith.constant 0 : i32
    %c0_i32_0 = arith.constant 0 : i32
    return %arg1, %arg0, %c0_i32 : i32, i32, i32
  }
  func.func @transform_1(%arg0: i32, %arg1: i32) -> (i32, i32) {
    %c0_i32 = arith.constant 0 : i32
    %c0_i32_0 = arith.constant 0 : i32
    %c0_i32_1 = arith.constant 0 : i32
    return %c0_i32, %c0_i32_0 : i32, i32
  }
  func.func @transform_2(%arg0: i32, %arg1: i32) -> (i32, i32) {
    %c0_i32 = arith.constant 0 : i32
    %c0_i32_0 = arith.constant 0 : i32
    %c0_i32_1 = arith.constant 0 : i32
    return %c0_i32, %c0_i32_0 : i32, i32
  }
  func.func @transform_3(%arg0: i32, %arg1: i32) -> (i32, i32) {
    %c0_i32 = arith.constant 0 : i32
    %c0_i32_0 = arith.constant 0 : i32
    %c0_i32_1 = arith.constant 0 : i32
    return %c0_i32, %c0_i32_0 : i32, i32
  }
  func.func @transform_4(%arg0: i32, %arg1: i32) -> (i32, i32) {
    %c0_i32 = arith.constant 0 : i32
    %c0_i32_0 = arith.constant 0 : i32
    return %arg0, %c0_i32 : i32, i32
  }
  func.func @transform_5(%arg0: i32, %arg1: i32) -> (i32, i32) {
    %c0_i32 = arith.constant 0 : i32
    %c0_i32_0 = arith.constant 0 : i32
    return %arg0, %c0_i32 : i32, i32
  }
  func.func @transform_6(%arg0: i32, %arg1: i32) -> (i32, i32, i32) {
    %c0_i32 = arith.constant 0 : i32
    %c0_i32_0 = arith.constant 0 : i32
    return %arg1, %arg0, %c0_i32 : i32, i32, i32
  }
  func.func @transform_7(%arg0: i32, %arg1: i32) -> (i32, i32) {
    %c0_i32 = arith.constant 0 : i32
    %c0_i32_0 = arith.constant 0 : i32
    return %arg0, %c0_i32 : i32, i32
  }
  func.func @transform_8(%arg0: i32, %arg1: i32) -> (i32, i32) {
    %c0_i32 = arith.constant 0 : i32
    %c0_i32_0 = arith.constant 0 : i32
    return %arg0, %c0_i32 : i32, i32
  }
}

</mosaic_0001>

<llo_original>
// kernel: charseq_rnn_forward.1
$region0: #{charseq_rnn_forward.1}
  #allocation0 [shape = 'u32[]', space=smem, size = 0x4, offset = 0x4, fixed_abs, tag = 'smem constant byte address 0x4 - core index']
  #allocation1 [shape = 'u32[144,128]{1,0:T(1,128)}', space=vmem, size = 0x12000, scoped, tag = 'internal scratch']
  #allocation2 [shape = 'f32[8,128]{1,0:T(8,128)}', space=vmem, size = 0x1000, scoped, tag = 'scratch operand']
  #allocation3 [shape = 'f32[8,128]{1,0:T(8,128)}', space=vmem, size = 0x1000, scoped, tag = 'scratch operand']
  #allocation4 [shape = 'f32[32,128]{1,0:T(8,128)}', space=vmem, size = 0x4000, scoped, tag = 'scratch operand']
  %s0 = inlined_call_operand.vmem [shape: f32[8,8,512], index: 0, kind: input, shape index: {}]
  %s1 = inlined_call_operand.vmem [shape: f32[128,512], index: 1, kind: input, shape index: {}]
  %s2 = inlined_call_operand.vmem [shape: f32[128,128], index: 2, kind: input, shape index: {}]
  %s3 = inlined_call_operand.vmem [shape: f32[1,128], index: 3, kind: input, shape index: {}]
  %s4 = inlined_call_operand.vmem [shape: f32[8,128], index: 4, kind: input, shape index: {}]
  %s5 = inlined_call_operand.vmem [shape: f32[8,128], index: 5, kind: input, shape index: {}]
  %s6 = inlined_call_operand.vmem [shape: f32[8,8,128], index: 6, kind: output, shape index: {0}]
  %s7 = inlined_call_operand.vmem [shape: f32[8,128], index: 7, kind: output, shape index: {1}]
  %s8 = inlined_call_operand.vmem [shape: f32[8,128], index: 8, kind: output, shape index: {2}]
  %9 = xla_tuple %s6, %s7, %s8
  %s10 = sld [smem:[#allocation0]]
  $region81: #{charseq_rnn_forward.1} parent=0
    _
  %s12 = ssub.s32 1, %s10
  %s13 = scalar_select 0, %s12, %s10
  loop: start=0, step=1, limit=4
  $region2: #{charseq_rnn_forward.1} parent=0 // loop_pre_header
    _
  $region3: #{charseq_rnn_forward.1} parent=0 // loop_header
    %s15 = sphi 0, %s19
    %p16 = scmp.ge.s32.totalorder %s15, 4
    %s22 = sphi 0, %s34
    %s23 = sphi 0, %s30
    %s24 = sphi 0, %s22
    %s25 = sphi 0, %s23
    %s26 = sphi 0, %s24
    %s27 = sphi 0, %s25
    %s39 = sphi 0, %s41
    %s42 = sphi 0, %s39
    %s43 = sphi 0, %s42
    %s59 = sphi 0, %s43
    %s63 = sphi 0, %s63
    %s65 = sphi 0, %s63
    %s66 = sphi 0, %s65
    %s80 = sphi 0, %s66
    %s84 = sphi 0, %s84
    %s86 = sphi 0, %s84
    %s87 = sphi 0, %s86
    %s101 = sphi 0, %s87
    %s105 = sphi 0, %s105
    %s107 = sphi 0, %s105
    %s108 = sphi 0, %s107
    %s122 = sphi 0, %s108
    %s128 = sphi 0, %s130
    %s131 = sphi 0, %s128
    %s132 = sphi 0, %s131
    %s148 = sphi 0, %s132
    %s154 = sphi 0, %s156
    %s157 = sphi 0, %s154
    %s158 = sphi 0, %s157
    %s174 = sphi 0, %s158
    %s182 = sphi 0, %s184
    %s185 = sphi 0, %s182
    %s186 = sphi 0, %s185
    %s202 = sphi 0, %s186
    %s208 = sphi 0, %s210
    %s211 = sphi 0, %s208
    %s212 = sphi 0, %s211
    %s228 = sphi 0, %s212
    %s234 = sphi 0, %s236
    %s237 = sphi 0, %s234
    %s238 = sphi 0, %s237
    %s254 = sphi 0, %s238
  $region4: #{charseq_rnn_forward.1} parent=0 // loop_header_branch
    %18 = sbr.rel (%p16) target = $region8
  $region5: #{charseq_rnn_forward.1} parent=0 // loop_body
    %s20 = ssub.s32 %s15, 1
    %s21 = ssub.s32 %s15, 2
    %s28 = sadd.s32 1, %s23
    %p29 = scmp.ge.s32.totalorder %s28, 2
    %s30 = scalar_select %p29, 0, %s28
    %s31 = sadd.s32 1, %s22
    %s32 = scalar_select %p29, %s31, %s22
    %p33 = scmp.ge.s32.totalorder %s32, 1
    %s34 = scalar_select %p33, 0, %s32
    %s35 = ssub.s32 %s23, %s30
    %s36 = ssub.s32 %s22, %s34
    %s37 = sor.u32 %s35, %s36
    %p38 = scmp.eq.s32.totalorder %s37, 0
    %s40 = sadd.s32 %s39, 1
    %s41 = scalar_select %p38, %s39, %s40
    %p44 = pneg %p38
    %p45 = scmp.eq.s32.totalorder %s15, 1
    %p46 = por %p44, %p45
    %p47 = scmp.ne.s32.totalorder %s39, %s42
    %p48 = scmp.eq.s32.totalorder %s15, 0
    %p49 = por %p47, %p48
    %p50 = scmp.ne.s32.totalorder %s39, %s42
    %p51 = scmp.eq.s32.totalorder %s20, 1
    %p52 = por %p50, %p51
    %p53 = scmp.ne.s32.totalorder %s42, %s43
    %p54 = scmp.eq.s32.totalorder %s20, 0
    %p55 = por %p53, %p54
    %p56 = scmp.ne.s32.totalorder %s42, %s43
    %p57 = scmp.eq.s32.totalorder %s21, 1
    %p58 = por %p56, %p57
    %p60 = scmp.ne.s32.totalorder %s43, %s59
    %p61 = scmp.eq.s32.totalorder %s21, 0
    %p62 = por %p60, %p61
    %s64 = sadd.s32 %s63, 1
    %p67 = scmp.eq.s32.totalorder %s15, 1
    %p68 = scmp.ne.s32.totalorder %s63, %s65
    %p69 = scmp.eq.s32.totalorder %s15, 0
    %p70 = por %p68, %p69
    %p71 = scmp.ne.s32.totalorder %s63, %s65
    %p72 = scmp.eq.s32.totalorder %s20, 1
    %p73 = por %p71, %p72
    %p74 = scmp.ne.s32.totalorder %s65, %s66
    %p75 = scmp.eq.s32.totalorder %s20, 0
    %p76 = por %p74, %p75
    %p77 = scmp.ne.s32.totalorder %s65, %s66
    %p78 = scmp.eq.s32.totalorder %s21, 1
    %p79 = por %p77, %p78
    %p81 = scmp.ne.s32.totalorder %s66, %s80
    %p82 = scmp.eq.s32.totalorder %s21, 0
    %p83 = por %p81, %p82
    %s85 = sadd.s32 %s84, 1
    %p88 = scmp.eq.s32.totalorder %s15, 1
    %p89 = scmp.ne.s32.totalorder %s84, %s86
    %p90 = scmp.eq.s32.totalorder %s15, 0
    %p91 = por %p89, %p90
    %p92 = scmp.ne.s32.totalorder %s84, %s86
    %p93 = scmp.eq.s32.totalorder %s20, 1
    %p94 = por %p92, %p93
    %p95 = scmp.ne.s32.totalorder %s86, %s87
    %p96 = scmp.eq.s32.totalorder %s20, 0
    %p97 = por %p95, %p96
    %p98 = scmp.ne.s32.totalorder %s86, %s87
    %p99 = scmp.eq.s32.totalorder %s21, 1
    %p100 = por %p98, %p99
    %p102 = scmp.ne.s32.totalorder %s87, %s101
    %p103 = scmp.eq.s32.totalorder %s21, 0
    %p104 = por %p102, %p103
    %s106 = sadd.s32 %s105, 1
    %p109 = scmp.eq.s32.totalorder %s15, 1
    %p110 = scmp.ne.s32.totalorder %s105, %s107
    %p111 = scmp.eq.s32.totalorder %s15, 0
    %p112 = por %p110, %p111
    %p113 = scmp.ne.s32.totalorder %s105, %s107
    %p114 = scmp.eq.s32.totalorder %s20, 1
    %p115 = por %p113, %p114
    %p116 = scmp.ne.s32.totalorder %s107, %s108
    %p117 = scmp.eq.s32.totalorder %s20, 0
    %p118 = por %p116, %p117
    %p119 = scmp.ne.s32.totalorder %s107, %s108
    %p120 = scmp.eq.s32.totalorder %s21, 1
    %p121 = por %p119, %p120
    %p123 = scmp.ne.s32.totalorder %s108, %s122
    %p124 = scmp.eq.s32.totalorder %s21, 0
    %p125 = por %p123, %p124
    %s126 = ssub.s32 %s22, %s34
    %p127 = scmp.eq.s32.totalorder %s126, 0
    %s129 = sadd.s32 %s128, 1
    %s130 = scalar_select %p127, %s128, %s129
    %p133 = pneg %p127
    %p134 = scmp.eq.s32.totalorder %s15, 1
    %p135 = por %p133, %p134
    %p136 = scmp.ne.s32.totalorder %s128, %s131
    %p137 = scmp.eq.s32.totalorder %s15, 0
    %p138 = por %p136, %p137
    %p139 = scmp.ne.s32.totalorder %s128, %s131
    %p140 = scmp.eq.s32.totalorder %s20, 1
    %p141 = por %p139, %p140
    %p142 = scmp.ne.s32.totalorder %s131, %s132
    %p143 = scmp.eq.s32.totalorder %s20, 0
    %p144 = por %p142, %p143
    %p145 = scmp.ne.s32.totalorder %s131, %s132
    %p146 = scmp.eq.s32.totalorder %s21, 1
    %p147 = por %p145, %p146
    %p149 = scmp.ne.s32.totalorder %s132, %s148
    %p150 = scmp.eq.s32.totalorder %s21, 0
    %p151 = por %p149, %p150
    %s152 = ssub.s32 %s22, %s34
    %p153 = scmp.eq.s32.totalorder %s152, 0
    %s155 = sadd.s32 %s154, 1
    %s156 = scalar_select %p153, %s154, %s155
    %p159 = pneg %p153
    %p160 = scmp.eq.s32.totalorder %s15, 1
    %p161 = por %p159, %p160
    %p162 = scmp.ne.s32.totalorder %s154, %s157
    %p163 = scmp.eq.s32.totalorder %s15, 0
    %p164 = por %p162, %p163
    %p165 = scmp.ne.s32.totalorder %s154, %s157
    %p166 = scmp.eq.s32.totalorder %s20, 1
    %p167 = por %p165, %p166
    %p168 = scmp.ne.s32.totalorder %s157, %s158
    %p169 = scmp.eq.s32.totalorder %s20, 0
    %p170 = por %p168, %p169
    %p171 = scmp.ne.s32.totalorder %s157, %s158
    %p172 = scmp.eq.s32.totalorder %s21, 1
    %p173 = por %p171, %p172
    %p175 = scmp.ne.s32.totalorder %s158, %s174
    %p176 = scmp.eq.s32.totalorder %s21, 0
    %p177 = por %p175, %p176
    %s178 = ssub.s32 %s23, %s30
    %s179 = ssub.s32 %s22, %s34
    %s180 = sor.u32 %s178, %s179
    %p181 = scmp.eq.s32.totalorder %s180, 0
    %s183 = sadd.s32 %s182, 1
    %s184 = scalar_select %p181, %s182, %s183
    %p187 = pneg %p181
    %p188 = scmp.eq.s32.totalorder %s15, 1
    %p189 = por %p187, %p188
    %p190 = scmp.ne.s32.totalorder %s182, %s185
    %p191 = scmp.eq.s32.totalorder %s15, 0
    %p192 = por %p190, %p191
    %p193 = scmp.ne.s32.totalorder %s182, %s185
    %p194 = scmp.eq.s32.totalorder %s20, 1
    %p195 = por %p193, %p194
    %p196 = scmp.ne.s32.totalorder %s185, %s186
    %p197 = scmp.eq.s32.totalorder %s20, 0
    %p198 = por %p196, %p197
    %p199 = scmp.ne.s32.totalorder %s185, %s186
    %p200 = scmp.eq.s32.totalorder %s21, 1
    %p201 = por %p199, %p200
    %p203 = scmp.ne.s32.totalorder %s186, %s202
    %p204 = scmp.eq.s32.totalorder %s21, 0
    %p205 = por %p203, %p204
    %s206 = ssub.s32 %s22, %s34
    %p207 = scmp.eq.s32.totalorder %s206, 0
    %s209 = sadd.s32 %s208, 1
    %s210 = scalar_select %p207, %s208, %s209
    %p213 = pneg %p207
    %p214 = scmp.eq.s32.totalorder %s15, 1
    %p215 = por %p213, %p214
    %p216 = scmp.ne.s32.totalorder %s208, %s211
    %p217 = scmp.eq.s32.totalorder %s15, 0
    %p218 = por %p216, %p217
    %p219 = scmp.ne.s32.totalorder %s208, %s211
    %p220 = scmp.eq.s32.totalorder %s20, 1
    %p221 = por %p219, %p220
    %p222 = scmp.ne.s32.totalorder %s211, %s212
    %p223 = scmp.eq.s32.totalorder %s20, 0
    %p224 = por %p222, %p223
    %p225 = scmp.ne.s32.totalorder %s211, %s212
    %p226 = scmp.eq.s32.totalorder %s21, 1
    %p227 = por %p225, %p226
    %p229 = scmp.ne.s32.totalorder %s212, %s228
    %p230 = scmp.eq.s32.totalorder %s21, 0
    %p231 = por %p229, %p230
    %s232 = ssub.s32 %s22, %s34
    %p233 = scmp.eq.s32.totalorder %s232, 0
    %s235 = sadd.s32 %s234, 1
    %s236 = scalar_select %p233, %s234, %s235
    %p239 = pneg %p233
    %p240 = scmp.eq.s32.totalorder %s15, 1
    %p241 = por %p239, %p240
    %p242 = scmp.ne.s32.totalorder %s234, %s237
    %p243 = scmp.eq.s32.totalorder %s15, 0
    %p244 = por %p242, %p243
    %p245 = scmp.ne.s32.totalorder %s234, %s237
    %p246 = scmp.eq.s32.totalorder %s20, 1
    %p247 = por %p245, %p246
    %p248 = scmp.ne.s32.totalorder %s237, %s238
    %p249 = scmp.eq.s32.totalorder %s20, 0
    %p250 = por %p248, %p249
    %p251 = scmp.ne.s32.totalorder %s237, %s238
    %p252 = scmp.eq.s32.totalorder %s21, 1
    %p253 = por %p251, %p252
    %p255 = scmp.ne.s32.totalorder %s238, %s254
    %p256 = scmp.eq.s32.totalorder %s21, 0
    %p257 = por %p255, %p256
    %p258 = scmp.le.s32.totalorder 1, %s15
    %p259 = scmp.lt.s32.totalorder %s15, 3
    %p260 = pnand %p258, %p259
    %p261 = pneg %p260
    // Predicated region
    $region9: #{charseq_rnn_forward.1} parent=5 // pred_check
      _
    $region10: #{charseq_rnn_forward.1} parent=5 // pred_check_branch
      %263 = sbr.rel (%p260) target = $region12
    $region11: #{charseq_rnn_forward.1} parent=5 // pred_region
      %s264 = ssub.s32 %s15, 1
      // Predicated region
      $region13: #{charseq_rnn_forward.1} parent=11 // pred_check
        %p265 = pneg %p76
      $region14: #{charseq_rnn_forward.1} parent=11 // pred_check_branch
        %267 = sbr.rel (%p265) target = $region16
      $region15: #{charseq_rnn_forward.1} parent=11 // pred_region
        _
      $region16: #{charseq_rnn_forward.1} parent=11 // pred_fallthru
        _
      // Predicated region
      $region17: #{charseq_rnn_forward.1} parent=11 // pred_check
        %p268 = pneg %p97
      $region18: #{charseq_rnn_forward.1} parent=11 // pred_check_branch
        %270 = sbr.rel (%p268) target = $region20
      $region19: #{charseq_rnn_forward.1} parent=11 // pred_region
        _
      $region20: #{charseq_rnn_forward.1} parent=11 // pred_fallthru
        _
      // Predicated region
      $region21: #{charseq_rnn_forward.1} parent=11 // pred_check
        %p271 = pneg %p118
      $region22: #{charseq_rnn_forward.1} parent=11 // pred_check_branch
        %273 = sbr.rel (%p271) target = $region24
      $region23: #{charseq_rnn_forward.1} parent=11 // pred_region
        _
      $region24: #{charseq_rnn_forward.1} parent=11 // pred_fallthru
        _
      // Predicated region
      $region25: #{charseq_rnn_forward.1} parent=11 // pred_check
        %p274 = pneg %p144
      $region26: #{charseq_rnn_forward.1} parent=11 // pred_check_branch
        %276 = sbr.rel (%p274) target = $region28
      $region27: #{charseq_rnn_forward.1} parent=11 // pred_region
        %p277 = scmp.lt.s32.totalorder %s24, 0
        %s278 = scalar_select %p277, %s24, 0
        %s279 = smul.addr %s278, 8
        %s280 = scalar_lea.vmem %s4, %s279
      $region28: #{charseq_rnn_forward.1} parent=11 // pred_fallthru
        _
      // Predicated region
      $region29: #{charseq_rnn_forward.1} parent=11 // pred_check
        %p281 = pneg %p170
      $region30: #{charseq_rnn_forward.1} parent=11 // pred_check_branch
        %283 = sbr.rel (%p281) target = $region32
      $region31: #{charseq_rnn_forward.1} parent=11 // pred_region
        %p284 = scmp.lt.s32.totalorder %s24, 0
        %s285 = scalar_select %p284, %s24, 0
        %s286 = smul.addr %s285, 8
        %s287 = scalar_lea.vmem %s5, %s286
      $region32: #{charseq_rnn_forward.1} parent=11 // pred_fallthru
        _
    $region12: #{charseq_rnn_forward.1} parent=5 // pred_fallthru
      _
    %p288 = scmp.lt.s32.totalorder %s15, 2
    // Predicated region
    $region33: #{charseq_rnn_forward.1} parent=5 // pred_check
      %p289 = pneg %p288
    $region34: #{charseq_rnn_forward.1} parent=5 // pred_check_branch
      %291 = sbr.rel (%p289) target = $region36
    $region35: #{charseq_rnn_forward.1} parent=5 // pred_region
      // Predicated region
      $region37: #{charseq_rnn_forward.1} parent=35 // pred_check
        %p292 = pneg %p49
      $region38: #{charseq_rnn_forward.1} parent=35 // pred_check_branch
        %294 = sbr.rel (%p292) target = $region40
      $region39: #{charseq_rnn_forward.1} parent=35 // pred_region
        %s295 = smul.u32 4, %s23
        %p296 = scmp.lt.s32.totalorder %s295, 7
        %s297 = scalar_select %p296, %s295, 7
        %p298 = scmp.lt.s32.totalorder %s22, 0
        %s299 = scalar_select %p298, %s22, 0
        %s300 = smul.addr %s299, 4
        %s301 = smul.addr %s297, 4
        %s302 = sadd.s32 %s300, %s301
        %s303 = smul.addr %s302, 8
        %s304 = scalar_lea.vmem %s0, %s303
        %s305 = smul.u32 4, %s23
      $region40: #{charseq_rnn_forward.1} parent=35 // pred_fallthru
        _
    $region36: #{charseq_rnn_forward.1} parent=5 // pred_fallthru
      _
    %p306 = scmp.le.s32.totalorder 1, %s15
    %p307 = scmp.lt.s32.totalorder %s15, 3
    %p308 = pnand %p306, %p307
    %p309 = pneg %p308
    // Predicated region
    $region41: #{charseq_rnn_forward.1} parent=5 // pred_check
      _
    $region42: #{charseq_rnn_forward.1} parent=5 // pred_check_branch
      %311 = sbr.rel (%p308) target = $region44
    $region43: #{charseq_rnn_forward.1} parent=5 // pred_region
      %s312 = ssub.s32 %s15, 1
      %s313 = smul.u32 4, %s25
      %p314 = scmp.lt.s32.totalorder %s313, 7
      %s315 = scalar_select %p314, %s313, 7
      %p316 = scmp.lt.s32.totalorder %s24, 0
      %s317 = scalar_select %p316, %s24, 0
      %s318 = smul.addr %s317, 4
      %s319 = smul.addr %s315, 4
      %s320 = sadd.s32 %s318, %s319
      %s321 = smul.addr %s320, 8
      %s322 = scalar_lea.vmem %s0, %s321
      %p323 = pneg %p55
      %p324 = pneg %p52
      %p325 = pneg %p76
      %p326 = pneg %p73
      %p327 = pneg %p97
      %p328 = pneg %p94
      %p329 = pneg %p118
      %p330 = pneg %p115
      %p331 = scmp.lt.s32.totalorder %s24, 0
      %s332 = scalar_select %p331, %s24, 0
      %s333 = smul.addr %s332, 8
      %s334 = scalar_lea.vmem %s4, %s333
      %p335 = pneg %p144
      %p336 = pneg %p141
      %p337 = scmp.lt.s32.totalorder %s24, 0
      %s338 = scalar_select %p337, %s24, 0
      %s339 = smul.addr %s338, 8
      %s340 = scalar_lea.vmem %s5, %s339
      %p341 = pneg %p170
      %p342 = pneg %p167
      %p343 = pneg %p198
      %p344 = pneg %p195
      %s345 = smul.u32 4, %s25
      %p346 = scmp.lt.s32.totalorder %s345, 7
      %s347 = scalar_select %p346, %s345, 7
      %p348 = scmp.lt.s32.totalorder %s24, 0
      %s349 = scalar_select %p348, %s24, 0
      %s350 = sadd.s32 %s349, %s347
      %s351 = smul.addr %s350, 8
      %s352 = scalar_lea.vmem %s6, %s351
      %p353 = pneg %p224
      %p354 = pneg %p221
      %p355 = scmp.lt.s32.totalorder %s24, 0
      %s356 = scalar_select %p355, %s24, 0
      %s357 = smul.addr %s356, 8
      %s358 = scalar_lea.vmem %s7, %s357
      %p359 = pneg %p250
      %p360 = pneg %p247
      %p361 = scmp.lt.s32.totalorder %s24, 0
      %s362 = scalar_select %p361, %s24, 0
      %s363 = smul.addr %s362, 8
      %s364 = scalar_lea.vmem %s8, %s363
      %s365 = smul.u32 4, %s25
      %p366 = scmp.lt.s32.totalorder %s365, 7
      %s367 = scalar_select %p366, %s365, 7
      %p368 = scmp.lt.s32.totalorder %s24, 0
      %s369 = scalar_select %p368, %s24, 0
      %s370 = smul.addr %s369, 4
      %s371 = smul.addr %s367, 4
      %s372 = sadd.s32 %s370, %s371
      %s373 = smul.addr %s372, 8
      %s374 = scalar_lea.vmem %s0, %s373
      %s375 = smul.u32 4, %s25
      %p376 = scmp.lt.s32.totalorder %s24, 0
      %s377 = scalar_select %p376, %s24, 0
      %s378 = smul.addr %s377, 8
      %s379 = scalar_lea.vmem %s4, %s378
      %p380 = scmp.lt.s32.totalorder %s24, 0
      %s381 = scalar_select %p380, %s24, 0
      %s382 = smul.addr %s381, 8
      %s383 = scalar_lea.vmem %s5, %s382
      %s384 = smul.u32 4, %s25
      %p385 = scmp.lt.s32.totalorder %s384, 7
      %s386 = scalar_select %p385, %s384, 7
      %p387 = scmp.lt.s32.totalorder %s24, 0
      %s388 = scalar_select %p387, %s24, 0
      %s389 = sadd.s32 %s388, %s386
      %s390 = smul.addr %s389, 8
      %s391 = scalar_lea.vmem %s6, %s390
      %s392 = smul.u32 4, %s25
      %p393 = scmp.lt.s32.totalorder %s24, 0
      %s394 = scalar_select %p393, %s24, 0
      %s395 = smul.addr %s394, 8
      %s396 = scalar_lea.vmem %s7, %s395
      %p397 = scmp.lt.s32.totalorder %s24, 0
      %s398 = scalar_select %p397, %s24, 0
      %s399 = smul.addr %s398, 8
      %s400 = scalar_lea.vmem %s8, %s399
      %p401 = scmp.eq.s32.totalorder %s25, 0
      // Predicated region
      $region45: #{charseq_rnn_forward.1} parent=43 // pred_check
        %p402 = pneg %p401
      $region46: #{charseq_rnn_forward.1} parent=43 // pred_check_branch
        %404 = sbr.rel (%p402) target = $region48
      $region47: #{charseq_rnn_forward.1} parent=43 // pred_region
        %v405 = vld [vmem:[%s379] sm:$0xff]
        %406 = vst [vmem:[#allocation2] sm:$0xff] %v405
        %v407 = vld [vmem:[%s383] sm:$0xff]
        %408 = vst [vmem:[#allocation3] sm:$0xff] %v407
      $region48: #{charseq_rnn_forward.1} parent=43 // pred_fallthru
        _
      %v409 = vld [vmem:[%s1] sm:$0xff]
      %v410 = vld [vmem:[%s1 + $0x8] sm:$0xff]
      %v411 = vld [vmem:[%s1 + $0x10] sm:$0xff]
      %v412 = vld [vmem:[%s1 + $0x18] sm:$0xff]
      %v413 = vld [vmem:[%s1 + $0x20] sm:$0xff]
      %v414 = vld [vmem:[%s1 + $0x28] sm:$0xff]
      %v415 = vld [vmem:[%s1 + $0x30] sm:$0xff]
      %v416 = vld [vmem:[%s1 + $0x38] sm:$0xff]
      %v417 = vld [vmem:[%s1 + $0x40] sm:$0xff]
      %v418 = vld [vmem:[%s1 + $0x48] sm:$0xff]
      %v419 = vld [vmem:[%s1 + $0x50] sm:$0xff]
      %v420 = vld [vmem:[%s1 + $0x58] sm:$0xff]
      %v421 = vld [vmem:[%s1 + $0x60] sm:$0xff]
      %v422 = vld [vmem:[%s1 + $0x68] sm:$0xff]
      %v423 = vld [vmem:[%s1 + $0x70] sm:$0xff]
      %v424 = vld [vmem:[%s1 + $0x78] sm:$0xff]
      %v425 = vld [vmem:[%s1 + $0x80] sm:$0xff]
      %v426 = vld [vmem:[%s1 + $0x88] sm:$0xff]
      %v427 = vld [vmem:[%s1 + $0x90] sm:$0xff]
      %v428 = vld [vmem:[%s1 + $0x98] sm:$0xff]
      %v429 = vld [vmem:[%s1 + $0xa0] sm:$0xff]
      %v430 = vld [vmem:[%s1 + $0xa8] sm:$0xff]
      %v431 = vld [vmem:[%s1 + $0xb0] sm:$0xff]
      %v432 = vld [vmem:[%s1 + $0xb8] sm:$0xff]
      %v433 = vld [vmem:[%s1 + $0xc0] sm:$0xff]
      %v434 = vld [vmem:[%s1 + $0xc8] sm:$0xff]
      %v435 = vld [vmem:[%s1 + $0xd0] sm:$0xff]
      %v436 = vld [vmem:[%s1 + $0xd8] sm:$0xff]
      %v437 = vld [vmem:[%s1 + $0xe0] sm:$0xff]
      %v438 = vld [vmem:[%s1 + $0xe8] sm:$0xff]
      %v439 = vld [vmem:[%s1 + $0xf0] sm:$0xff]
      %v440 = vld [vmem:[%s1 + $0xf8] sm:$0xff]
      %v441 = vld [vmem:[%s1 + $0x100] sm:$0xff]
      %v442 = vld [vmem:[%s1 + $0x108] sm:$0xff]
      %v443 = vld [vmem:[%s1 + $0x110] sm:$0xff]
      %v444 = vld [vmem:[%s1 + $0x118] sm:$0xff]
      %v445 = vld [vmem:[%s1 + $0x120] sm:$0xff]
      %v446 = vld [vmem:[%s1 + $0x128] sm:$0xff]
      %v447 = vld [vmem:[%s1 + $0x130] sm:$0xff]
      %v448 = vld [vmem:[%s1 + $0x138] sm:$0xff]
      %v449 = vld [vmem:[%s1 + $0x140] sm:$0xff]
      %v450 = vld [vmem:[%s1 + $0x148] sm:$0xff]
      %v451 = vld [vmem:[%s1 + $0x150] sm:$0xff]
      %v452 = vld [vmem:[%s1 + $0x158] sm:$0xff]
      %v453 = vld [vmem:[%s1 + $0x160] sm:$0xff]
      %v454 = vld [vmem:[%s1 + $0x168] sm:$0xff]
      %v455 = vld [vmem:[%s1 + $0x170] sm:$0xff]
      %v456 = vld [vmem:[%s1 + $0x178] sm:$0xff]
      %v457 = vld [vmem:[%s1 + $0x180] sm:$0xff]
      %v458 = vld [vmem:[%s1 + $0x188] sm:$0xff]
      %v459 = vld [vmem:[%s1 + $0x190] sm:$0xff]
      %v460 = vld [vmem:[%s1 + $0x198] sm:$0xff]
      %v461 = vld [vmem:[%s1 + $0x1a0] sm:$0xff]
      %v462 = vld [vmem:[%s1 + $0x1a8] sm:$0xff]
      %v463 = vld [vmem:[%s1 + $0x1b0] sm:$0xff]
      %v464 = vld [vmem:[%s1 + $0x1b8] sm:$0xff]
      %v465 = vld [vmem:[%s1 + $0x1c0] sm:$0xff]
      %v466 = vld [vmem:[%s1 + $0x1c8] sm:$0xff]
      %v467 = vld [vmem:[%s1 + $0x1d0] sm:$0xff]
      %v468 = vld [vmem:[%s1 + $0x1d8] sm:$0xff]
      %v469 = vld [vmem:[%s1 + $0x1e0] sm:$0xff]
      %v470 = vld [vmem:[%s1 + $0x1e8] sm:$0xff]
      %v471 = vld [vmem:[%s1 + $0x1f0] sm:$0xff]
      %v472 = vld [vmem:[%s1 + $0x1f8] sm:$0xff]
      %v473 = vld [vmem:[#allocation2] sm:$0xff]
      %v474 = vld [vmem:[#allocation3] sm:$0xff]
      %v475 = vld [vmem:[%s374] sm:$0xff]
      %v476 = vld [vmem:[%s374 + $0x8] sm:$0xff]
      %v477 = vld [vmem:[%s374 + $0x10] sm:$0xff]
      %v478 = vld [vmem:[%s374 + $0x18] sm:$0xff]
      %479 = vmatprep.subr.mxu0 %v470
      %480 = vmatpush1.msra.mxu0 %v469
      %481 = vmatprep.subr.mxu0 %v466
      %482 = vmatpush1.msra.mxu0 %v465
      %483 = vmatprep.subr.mxu0 %v462
      %484 = vmatpush1.msra.mxu0 %v461
      %485 = vmatprep.subr.mxu0 %v458
      %486 = vmatpush1.msra.mxu0 %v457
      %487 = vmatprep.subr.mxu0 %v454
      %488 = vmatpush1.msra.mxu0 %v453
      %489 = vmatprep.subr.mxu0 %v450
      %490 = vmatpush1.msra.mxu0 %v449
      %491 = vmatprep.subr.mxu0 %v446
      %492 = vmatpush1.msra.mxu0 %v445
      %493 = vmatprep.subr.mxu0 %v442
      %494 = vmatpush1.msra.mxu0 %v441
      %495 = vmatprep.subr.mxu0 %v438
      %496 = vmatpush1.msra.mxu0 %v437
      %497 = vmatprep.subr.mxu0 %v434
      %498 = vmatpush1.msra.mxu0 %v433
      %499 = vmatprep.subr.mxu0 %v430
      %500 = vmatpush1.msra.mxu0 %v429
      %501 = vmatprep.subr.mxu0 %v426
      %502 = vmatpush1.msra.mxu0 %v425
      %503 = vmatprep.subr.mxu0 %v422
      %504 = vmatpush1.msra.mxu0 %v421
      %505 = vmatprep.subr.mxu0 %v418
      %506 = vmatpush1.msra.mxu0 %v417
      %507 = vmatprep.subr.mxu0 %v414
      %508 = vmatpush1.msra.mxu0 %v413
      %509 = vmatprep.subr.mxu0 %v410
      %510 = vmatpush1.msra.mxu0 %v409
      %511 = vmatprep.subr.mxu0 0.0
      %512 = vmatpush2.msra.mxu0 0.0
      %513 = vmatprep.subr.mxu0 0.0
      %514 = vmatpush2.msra.mxu0 0.0
      %515 = vmatprep.subr.mxu0 0.0
      %516 = vmatpush2.msra.mxu0 0.0
      %517 = vmatprep.subr.mxu0 0.0
      %518 = vmatpush2.msra.mxu0 0.0
      %519 = vmatprep.subr.mxu0 0.0
      %520 = vmatpush2.msra.mxu0 0.0
      %521 = vmatprep.subr.mxu0 0.0
      %522 = vmatpush2.msra.mxu0 0.0
      %523 = vmatprep.subr.mxu0 0.0
      %524 = vmatpush2.msra.mxu0 0.0
      %525 = vmatprep.subr.mxu0 0.0
      %526 = vmatpush2.msra.mxu0 0.0
      %527 = vmatprep.subr.mxu0 0.0
      %528 = vmatpush2.msra.mxu0 0.0
      %529 = vmatprep.subr.mxu0 0.0
      %530 = vmatpush2.msra.mxu0 0.0
      %531 = vmatprep.subr.mxu0 0.0
      %532 = vmatpush2.msra.mxu0 0.0
      %533 = vmatprep.subr.mxu0 0.0
      %534 = vmatpush2.msra.mxu0 0.0
      %535 = vmatprep.subr.mxu0 0.0
      %536 = vmatpush2.msra.mxu0 0.0
      %537 = vmatprep.subr.mxu0 0.0
      %538 = vmatpush2.msra.mxu0 0.0
      %539 = vmatprep.subr.mxu0 0.0
      %540 = vmatpush2.msra.mxu0 0.0
      %541 = vmatprep.subr.mxu0 0.0
      %542 = vmatpush2.msra.mxu0 0.0
      %543 = vmatprep.mubr.f32.mxu0 0.0
      %544 = vmatmul.mubr.f32.gmra.mxu0 %v473
      %v545 = vpop.f32.mrf.mxu0
      %v546 = vadd.f32 0.0, %v545
      %v547 = vpop.f32.mrf.mxu0
      %v548 = vadd.f32 0.0, %v547
      %549 = vdwg.mxu0
      %550 = vmatprep.subr.mxu0 %v472
      %551 = vmatpush1.msra.mxu0 %v471
      %552 = vmatprep.subr.mxu0 %v468
      %553 = vmatpush1.msra.mxu0 %v467
      %554 = vmatprep.subr.mxu0 %v464
      %555 = vmatpush1.msra.mxu0 %v463
      %556 = vmatprep.subr.mxu0 %v460
      %557 = vmatpush1.msra.mxu0 %v459
      %558 = vmatprep.subr.mxu0 %v456
      %559 = vmatpush1.msra.mxu0 %v455
      %560 = vmatprep.subr.mxu0 %v452
      %561 = vmatpush1.msra.mxu0 %v451
      %562 = vmatprep.subr.mxu0 %v448
      %563 = vmatpush1.msra.mxu0 %v447
      %564 = vmatprep.subr.mxu0 %v444
      %565 = vmatpush1.msra.mxu0 %v443
      %566 = vmatprep.subr.mxu0 %v440
      %567 = vmatpush1.msra.mxu0 %v439
      %568 = vmatprep.subr.mxu0 %v436
      %569 = vmatpush1.msra.mxu0 %v435
      %570 = vmatprep.subr.mxu0 %v432
      %571 = vmatpush1.msra.mxu0 %v431
      %572 = vmatprep.subr.mxu0 %v428
      %573 = vmatpush1.msra.mxu0 %v427
      %574 = vmatprep.subr.mxu0 %v424
      %575 = vmatpush1.msra.mxu0 %v423
      %576 = vmatprep.subr.mxu0 %v420
      %577 = vmatpush1.msra.mxu0 %v419
      %578 = vmatprep.subr.mxu0 %v416
      %579 = vmatpush1.msra.mxu0 %v415
      %580 = vmatprep.subr.mxu0 %v412
      %581 = vmatpush1.msra.mxu0 %v411
      %582 = vmatprep.subr.mxu0 0.0
      %583 = vmatpush2.msra.mxu0 0.0
      %584 = vmatprep.subr.mxu0 0.0
      %585 = vmatpush2.msra.mxu0 0.0
      %586 = vmatprep.subr.mxu0 0.0
      %587 = vmatpush2.msra.mxu0 0.0
      %588 = vmatprep.subr.mxu0 0.0
      %589 = vmatpush2.msra.mxu0 0.0
      %590 = vmatprep.subr.mxu0 0.0
      %591 = vmatpush2.msra.mxu0 0.0
      %592 = vmatprep.subr.mxu0 0.0
      %593 = vmatpush2.msra.mxu0 0.0
      %594 = vmatprep.subr.mxu0 0.0
      %595 = vmatpush2.msra.mxu0 0.0
      %596 = vmatprep.subr.mxu0 0.0
      %597 = vmatpush2.msra.mxu0 0.0
      %598 = vmatprep.subr.mxu0 0.0
      %599 = vmatpush2.msra.mxu0 0.0
      %600 = vmatprep.subr.mxu0 0.0
      %601 = vmatpush2.msra.mxu0 0.0
      %602 = vmatprep.subr.mxu0 0.0
      %603 = vmatpush2.msra.mxu0 0.0
      %604 = vmatprep.subr.mxu0 0.0
      %605 = vmatpush2.msra.mxu0 0.0
      %606 = vmatprep.subr.mxu0 0.0
      %607 = vmatpush2.msra.mxu0 0.0
      %608 = vmatprep.subr.mxu0 0.0
      %609 = vmatpush2.msra.mxu0 0.0
      %610 = vmatprep.subr.mxu0 0.0
      %611 = vmatpush2.msra.mxu0 0.0
      %612 = vmatprep.subr.mxu0 0.0
      %613 = vmatpush2.msra.mxu0 0.0
      %614 = vmatprep.mubr.f32.mxu0 0.0
      %615 = vmatmul.mubr.f32.gmra.mxu0 %v473
      %v616 = vpop.f32.mrf.mxu0
      %v617 = vadd.f32 0.0, %v616
      %v618 = vpop.f32.mrf.mxu0
      %v619 = vadd.f32 0.0, %v618
      %620 = vdwg.mxu0
      %v621 = vadd.f32 %v475, %v546
      %v622 = vadd.f32 %v476, %v548
      %v623 = vadd.f32 %v477, %v617
      %v624 = vadd.f32 %v478, %v619
      %v625 = vxor.u32 %v621, 2147483648
      %v626 = vmul.f32 %v625, 1.442695
      %v627 = vpow.pop %v626
      %v628 = vadd.f32 %v627, 1.0
      %v629 = vrcp.pop %v628
      %v630 = vmul.f32 1.0, %v629
      %v631 = vxor.u32 %v622, 2147483648
      %v632 = vmul.f32 %v631, 1.442695
      %v633 = vpow.pop %v632
      %v634 = vadd.f32 %v633, 1.0
      %v635 = vrcp.pop %v634
      %v636 = vmul.f32 1.0, %v635
      %v637 = vtanh.pop %v623
      %v638 = vxor.u32 %v624, 2147483648
      %v639 = vmul.f32 %v638, 1.442695
      %v640 = vpow.pop %v639
      %v641 = vadd.f32 %v640, 1.0
      %v642 = vrcp.pop %v641
      %v643 = vmul.f32 1.0, %v642
      %v644 = vmul.f32 %v636, %v474
      %v645 = vmul.f32 %v630, %v637
      %v646 = vadd.f32 %v644, %v645
      %v647 = vtanh.pop %v646
      %v648 = vmul.f32 %v643, %v647
      %649 = vst [vmem:[#allocation4] sm:$0xff] %v648
      %s650 = scalar_lea.vmem %s374, 32
      %v651 = vld [vmem:[%s650] sm:$0xff]
      %v652 = vld [vmem:[%s650 + $0x8] sm:$0xff]
      %v653 = vld [vmem:[%s650 + $0x10] sm:$0xff]
      %v654 = vld [vmem:[%s650 + $0x18] sm:$0xff]
      %655 = vmatprep.subr.mxu0 %v470
      %656 = vmatpush1.msra.mxu0 %v469
      %657 = vmatprep.subr.mxu0 %v466
      %658 = vmatpush1.msra.mxu0 %v465
      %659 = vmatprep.subr.mxu0 %v462
      %660 = vmatpush1.msra.mxu0 %v461
      %661 = vmatprep.subr.mxu0 %v458
      %662 = vmatpush1.msra.mxu0 %v457
      %663 = vmatprep.subr.mxu0 %v454
      %664 = vmatpush1.msra.mxu0 %v453
      %665 = vmatprep.subr.mxu0 %v450
      %666 = vmatpush1.msra.mxu0 %v449
      %667 = vmatprep.subr.mxu0 %v446
      %668 = vmatpush1.msra.mxu0 %v445
      %669 = vmatprep.subr.mxu0 %v442
      %670 = vmatpush1.msra.mxu0 %v441
      %671 = vmatprep.subr.mxu0 %v438
      %672 = vmatpush1.msra.mxu0 %v437
      %673 = vmatprep.subr.mxu0 %v434
      %674 = vmatpush1.msra.mxu0 %v433
      %675 = vmatprep.subr.mxu0 %v430
      %676 = vmatpush1.msra.mxu0 %v429
      %677 = vmatprep.subr.mxu0 %v426
      %678 = vmatpush1.msra.mxu0 %v425
      %679 = vmatprep.subr.mxu0 %v422
      %680 = vmatpush1.msra.mxu0 %v421
      %681 = vmatprep.subr.mxu0 %v418
      %682 = vmatpush1.msra.mxu0 %v417
      %683 = vmatprep.subr.mxu0 %v414
      %684 = vmatpush1.msra.mxu0 %v413
      %685 = vmatprep.subr.mxu0 %v410
      %686 = vmatpush1.msra.mxu0 %v409
      %687 = vmatprep.subr.mxu0 0.0
      %688 = vmatpush2.msra.mxu0 0.0
      %689 = vmatprep.subr.mxu0 0.0
      %690 = vmatpush2.msra.mxu0 0.0
      %691 = vmatprep.subr.mxu0 0.0
      %692 = vmatpush2.msra.mxu0 0.0
      %693 = vmatprep.subr.mxu0 0.0
      %694 = vmatpush2.msra.mxu0 0.0
      %695 = vmatprep.subr.mxu0 0.0
      %696 = vmatpush2.msra.mxu0 0.0
      %697 = vmatprep.subr.mxu0 0.0
      %698 = vmatpush2.msra.mxu0 0.0
      %699 = vmatprep.subr.mxu0 0.0
      %700 = vmatpush2.msra.mxu0 0.0
      %701 = vmatprep.subr.mxu0 0.0
      %702 = vmatpush2.msra.mxu0 0.0
      %703 = vmatprep.subr.mxu0 0.0
      %704 = vmatpush2.msra.mxu0 0.0
      %705 = vmatprep.subr.mxu0 0.0
      %706 = vmatpush2.msra.mxu0 0.0
      %707 = vmatprep.subr.mxu0 0.0
      %708 = vmatpush2.msra.mxu0 0.0
      %709 = vmatprep.subr.mxu0 0.0
      %710 = vmatpush2.msra.mxu0 0.0
      %711 = vmatprep.subr.mxu0 0.0
      %712 = vmatpush2.msra.mxu0 0.0
      %713 = vmatprep.subr.mxu0 0.0
      %714 = vmatpush2.msra.mxu0 0.0
      %715 = vmatprep.subr.mxu0 0.0
      %716 = vmatpush2.msra.mxu0 0.0
      %717 = vmatprep.subr.mxu0 0.0
      %718 = vmatpush2.msra.mxu0 0.0
      %719 = vmatprep.mubr.f32.mxu0 0.0
      %720 = vmatmul.mubr.f32.gmra.mxu0 %v648
      %v721 = vpop.f32.mrf.mxu0
      %v722 = vadd.f32 0.0, %v721
      %v723 = vpop.f32.mrf.mxu0
      %v724 = vadd.f32 0.0, %v723
      %725 = vdwg.mxu0
      %726 = vmatprep.subr.mxu0 %v472
      %727 = vmatpush1.msra.mxu0 %v471
      %728 = vmatprep.subr.mxu0 %v468
      %729 = vmatpush1.msra.mxu0 %v467
      %730 = vmatprep.subr.mxu0 %v464
      %731 = vmatpush1.msra.mxu0 %v463
      %732 = vmatprep.subr.mxu0 %v460
      %733 = vmatpush1.msra.mxu0 %v459
      %734 = vmatprep.subr.mxu0 %v456
      %735 = vmatpush1.msra.mxu0 %v455
      %736 = vmatprep.subr.mxu0 %v452
      %737 = vmatpush1.msra.mxu0 %v451
      %738 = vmatprep.subr.mxu0 %v448
      %739 = vmatpush1.msra.mxu0 %v447
      %740 = vmatprep.subr.mxu0 %v444
      %741 = vmatpush1.msra.mxu0 %v443
      %742 = vmatprep.subr.mxu0 %v440
      %743 = vmatpush1.msra.mxu0 %v439
      %744 = vmatprep.subr.mxu0 %v436
      %745 = vmatpush1.msra.mxu0 %v435
      %746 = vmatprep.subr.mxu0 %v432
      %747 = vmatpush1.msra.mxu0 %v431
      %748 = vmatprep.subr.mxu0 %v428
      %749 = vmatpush1.msra.mxu0 %v427
      %750 = vmatprep.subr.mxu0 %v424
      %751 = vmatpush1.msra.mxu0 %v423
      %752 = vmatprep.subr.mxu0 %v420
      %753 = vmatpush1.msra.mxu0 %v419
      %754 = vmatprep.subr.mxu0 %v416
      %755 = vmatpush1.msra.mxu0 %v415
      %756 = vmatprep.subr.mxu0 %v412
      %757 = vmatpush1.msra.mxu0 %v411
      %758 = vmatprep.subr.mxu0 0.0
      %759 = vmatpush2.msra.mxu0 0.0
      %760 = vmatprep.subr.mxu0 0.0
      %761 = vmatpush2.msra.mxu0 0.0
      %762 = vmatprep.subr.mxu0 0.0
      %763 = vmatpush2.msra.mxu0 0.0
      %764 = vmatprep.subr.mxu0 0.0
      %765 = vmatpush2.msra.mxu0 0.0
      %766 = vmatprep.subr.mxu0 0.0
      %767 = vmatpush2.msra.mxu0 0.0
      %768 = vmatprep.subr.mxu0 0.0
      %769 = vmatpush2.msra.mxu0 0.0
      %770 = vmatprep.subr.mxu0 0.0
      %771 = vmatpush2.msra.mxu0 0.0
      %772 = vmatprep.subr.mxu0 0.0
      %773 = vmatpush2.msra.mxu0 0.0
      %774 = vmatprep.subr.mxu0 0.0
      %775 = vmatpush2.msra.mxu0 0.0
      %776 = vmatprep.subr.mxu0 0.0
      %777 = vmatpush2.msra.mxu0 0.0
      %778 = vmatprep.subr.mxu0 0.0
      %779 = vmatpush2.msra.mxu0 0.0
      %780 = vmatprep.subr.mxu0 0.0
      %781 = vmatpush2.msra.mxu0 0.0
      %782 = vmatprep.subr.mxu0 0.0
      %783 = vmatpush2.msra.mxu0 0.0
      %784 = vmatprep.subr.mxu0 0.0
      %785 = vmatpush2.msra.mxu0 0.0
      %786 = vmatprep.subr.mxu0 0.0
      %787 = vmatpush2.msra.mxu0 0.0
      %788 = vmatprep.subr.mxu0 0.0
      %789 = vmatpush2.msra.mxu0 0.0
      %790 = vmatprep.mubr.f32.mxu0 0.0
      %791 = vmatmul.mubr.f32.gmra.mxu0 %v648
      %v792 = vpop.f32.mrf.mxu0
      %v793 = vadd.f32 0.0, %v792
      %v794 = vpop.f32.mrf.mxu0
      %v795 = vadd.f32 0.0, %v794
      %796 = vdwg.mxu0
      %v797 = vadd.f32 %v651, %v722
      %v798 = vadd.f32 %v652, %v724
      %v799 = vadd.f32 %v653, %v793
      %v800 = vadd.f32 %v654, %v795
      %v801 = vxor.u32 %v797, 2147483648
      %v802 = vmul.f32 %v801, 1.442695
      %v803 = vpow.pop %v802
      %v804 = vadd.f32 %v803, 1.0
      %v805 = vrcp.pop %v804
      %v806 = vmul.f32 1.0, %v805
      %v807 = vxor.u32 %v798, 2147483648
      %v808 = vmul.f32 %v807, 1.442695
      %v809 = vpow.pop %v808
      %v810 = vadd.f32 %v809, 1.0
      %v811 = vrcp.pop %v810
      %v812 = vmul.f32 1.0, %v811
      %v813 = vtanh.pop %v799
      %v814 = vxor.u32 %v800, 2147483648
      %v815 = vmul.f32 %v814, 1.442695
      %v816 = vpow.pop %v815
      %v817 = vadd.f32 %v816, 1.0
      %v818 = vrcp.pop %v817
      %v819 = vmul.f32 1.0, %v818
      %v820 = vmul.f32 %v812, %v646
      %v821 = vmul.f32 %v806, %v813
      %v822 = vadd.f32 %v820, %v821
      %v823 = vtanh.pop %v822
      %v824 = vmul.f32 %v819, %v823
      %825 = vst [vmem:[#allocation4 + $0x8] sm:$0xff] %v824
      %s826 = scalar_lea.vmem %s374, 64
      %v827 = vld [vmem:[%s826] sm:$0xff]
      %v828 = vld [vmem:[%s826 + $0x8] sm:$0xff]
      %v829 = vld [vmem:[%s826 + $0x10] sm:$0xff]
      %v830 = vld [vmem:[%s826 + $0x18] sm:$0xff]
      %831 = vmatprep.subr.mxu0 %v470
      %832 = vmatpush1.msra.mxu0 %v469
      %833 = vmatprep.subr.mxu0 %v466
      %834 = vmatpush1.msra.mxu0 %v465
      %835 = vmatprep.subr.mxu0 %v462
      %836 = vmatpush1.msra.mxu0 %v461
      %837 = vmatprep.subr.mxu0 %v458
      %838 = vmatpush1.msra.mxu0 %v457
      %839 = vmatprep.subr.mxu0 %v454
      %840 = vmatpush1.msra.mxu0 %v453
      %841 = vmatprep.subr.mxu0 %v450
      %842 = vmatpush1.msra.mxu0 %v449
      %843 = vmatprep.subr.mxu0 %v446
      %844 = vmatpush1.msra.mxu0 %v445
      %845 = vmatprep.subr.mxu0 %v442
      %846 = vmatpush1.msra.mxu0 %v441
      %847 = vmatprep.subr.mxu0 %v438
      %848 = vmatpush1.msra.mxu0 %v437
      %849 = vmatprep.subr.mxu0 %v434
      %850 = vmatpush1.msra.mxu0 %v433
      %851 = vmatprep.subr.mxu0 %v430
      %852 = vmatpush1.msra.mxu0 %v429
      %853 = vmatprep.subr.mxu0 %v426
      %854 = vmatpush1.msra.mxu0 %v425
      %855 = vmatprep.subr.mxu0 %v422
      %856 = vmatpush1.msra.mxu0 %v421
      %857 = vmatprep.subr.mxu0 %v418
      %858 = vmatpush1.msra.mxu0 %v417
      %859 = vmatprep.subr.mxu0 %v414
      %860 = vmatpush1.msra.mxu0 %v413
      %861 = vmatprep.subr.mxu0 %v410
      %862 = vmatpush1.msra.mxu0 %v409
      %863 = vmatprep.subr.mxu0 0.0
      %864 = vmatpush2.msra.mxu0 0.0
      %865 = vmatprep.subr.mxu0 0.0
      %866 = vmatpush2.msra.mxu0 0.0
      %867 = vmatprep.subr.mxu0 0.0
      %868 = vmatpush2.msra.mxu0 0.0
      %869 = vmatprep.subr.mxu0 0.0
      %870 = vmatpush2.msra.mxu0 0.0
      %871 = vmatprep.subr.mxu0 0.0
      %872 = vmatpush2.msra.mxu0 0.0
      %873 = vmatprep.subr.mxu0 0.0
      %874 = vmatpush2.msra.mxu0 0.0
      %875 = vmatprep.subr.mxu0 0.0
      %876 = vmatpush2.msra.mxu0 0.0
      %877 = vmatprep.subr.mxu0 0.0
      %878 = vmatpush2.msra.mxu0 0.0
      %879 = vmatprep.subr.mxu0 0.0
      %880 = vmatpush2.msra.mxu0 0.0
      %881 = vmatprep.subr.mxu0 0.0
      %882 = vmatpush2.msra.mxu0 0.0
      %883 = vmatprep.subr.mxu0 0.0
      %884 = vmatpush2.msra.mxu0 0.0
      %885 = vmatprep.subr.mxu0 0.0
      %886 = vmatpush2.msra.mxu0 0.0
      %887 = vmatprep.subr.mxu0 0.0
      %888 = vmatpush2.msra.mxu0 0.0
      %889 = vmatprep.subr.mxu0 0.0
      %890 = vmatpush2.msra.mxu0 0.0
      %891 = vmatprep.subr.mxu0 0.0
      %892 = vmatpush2.msra.mxu0 0.0
      %893 = vmatprep.subr.mxu0 0.0
      %894 = vmatpush2.msra.mxu0 0.0
      %895 = vmatprep.mubr.f32.mxu0 0.0
      %896 = vmatmul.mubr.f32.gmra.mxu0 %v824
      %v897 = vpop.f32.mrf.mxu0
      %v898 = vadd.f32 0.0, %v897
      %v899 = vpop.f32.mrf.mxu0
      %v900 = vadd.f32 0.0, %v899
      %901 = vdwg.mxu0
      %902 = vmatprep.subr.mxu0 %v472
      %903 = vmatpush1.msra.mxu0 %v471
      %904 = vmatprep.subr.mxu0 %v468
      %905 = vmatpush1.msra.mxu0 %v467
      %906 = vmatprep.subr.mxu0 %v464
      %907 = vmatpush1.msra.mxu0 %v463
      %908 = vmatprep.subr.mxu0 %v460
      %909 = vmatpush1.msra.mxu0 %v459
      %910 = vmatprep.subr.mxu0 %v456
      %911 = vmatpush1.msra.mxu0 %v455
      %912 = vmatprep.subr.mxu0 %v452
      %913 = vmatpush1.msra.mxu0 %v451
      %914 = vmatprep.subr.mxu0 %v448
      %915 = vmatpush1.msra.mxu0 %v447
      %916 = vmatprep.subr.mxu0 %v444
      %917 = vmatpush1.msra.mxu0 %v443
      %918 = vmatprep.subr.mxu0 %v440
      %919 = vmatpush1.msra.mxu0 %v439
      %920 = vmatprep.subr.mxu0 %v436
      %921 = vmatpush1.msra.mxu0 %v435
      %922 = vmatprep.subr.mxu0 %v432
      %923 = vmatpush1.msra.mxu0 %v431
      %924 = vmatprep.subr.mxu0 %v428
      %925 = vmatpush1.msra.mxu0 %v427
      %926 = vmatprep.subr.mxu0 %v424
      %927 = vmatpush1.msra.mxu0 %v423
      %928 = vmatprep.subr.mxu0 %v420
      %929 = vmatpush1.msra.mxu0 %v419
      %930 = vmatprep.subr.mxu0 %v416
      %931 = vmatpush1.msra.mxu0 %v415
      %932 = vmatprep.subr.mxu0 %v412
      %933 = vmatpush1.msra.mxu0 %v411
      %934 = vmatprep.subr.mxu0 0.0
      %935 = vmatpush2.msra.mxu0 0.0
      %936 = vmatprep.subr.mxu0 0.0
      %937 = vmatpush2.msra.mxu0 0.0
      %938 = vmatprep.subr.mxu0 0.0
      %939 = vmatpush2.msra.mxu0 0.0
      %940 = vmatprep.subr.mxu0 0.0
      %941 = vmatpush2.msra.mxu0 0.0
      %942 = vmatprep.subr.mxu0 0.0
      %943 = vmatpush2.msra.mxu0 0.0
      %944 = vmatprep.subr.mxu0 0.0
      %945 = vmatpush2.msra.mxu0 0.0
      %946 = vmatprep.subr.mxu0 0.0
      %947 = vmatpush2.msra.mxu0 0.0
      %948 = vmatprep.subr.mxu0 0.0
      %949 = vmatpush2.msra.mxu0 0.0
      %950 = vmatprep.subr.mxu0 0.0
      %951 = vmatpush2.msra.mxu0 0.0
      %952 = vmatprep.subr.mxu0 0.0
      %953 = vmatpush2.msra.mxu0 0.0
      %954 = vmatprep.subr.mxu0 0.0
      %955 = vmatpush2.msra.mxu0 0.0
      %956 = vmatprep.subr.mxu0 0.0
      %957 = vmatpush2.msra.mxu0 0.0
      %958 = vmatprep.subr.mxu0 0.0
      %959 = vmatpush2.msra.mxu0 0.0
      %960 = vmatprep.subr.mxu0 0.0
      %961 = vmatpush2.msra.mxu0 0.0
      %962 = vmatprep.subr.mxu0 0.0
      %963 = vmatpush2.msra.mxu0 0.0
      %964 = vmatprep.subr.mxu0 0.0
      %965 = vmatpush2.msra.mxu0 0.0
      %966 = vmatprep.mubr.f32.mxu0 0.0
      %967 = vmatmul.mubr.f32.gmra.mxu0 %v824
      %v968 = vpop.f32.mrf.mxu0
      %v969 = vadd.f32 0.0, %v968
      %v970 = vpop.f32.mrf.mxu0
      %v971 = vadd.f32 0.0, %v970
      %972 = vdwg.mxu0
      %v973 = vadd.f32 %v827, %v898
      %v974 = vadd.f32 %v828, %v900
      %v975 = vadd.f32 %v829, %v969
      %v976 = vadd.f32 %v830, %v971
      %v977 = vxor.u32 %v973, 2147483648
      %v978 = vmul.f32 %v977, 1.442695
      %v979 = vpow.pop %v978
      %v980 = vadd.f32 %v979, 1.0
      %v981 = vrcp.pop %v980
      %v982 = vmul.f32 1.0, %v981
      %v983 = vxor.u32 %v974, 2147483648
      %v984 = vmul.f32 %v983, 1.442695
      %v985 = vpow.pop %v984
      %v986 = vadd.f32 %v985, 1.0
      %v987 = vrcp.pop %v986
      %v988 = vmul.f32 1.0, %v987
      %v989 = vtanh.pop %v975
      %v990 = vxor.u32 %v976, 2147483648
      %v991 = vmul.f32 %v990, 1.442695
      %v992 = vpow.pop %v991
      %v993 = vadd.f32 %v992, 1.0
      %v994 = vrcp.pop %v993
      %v995 = vmul.f32 1.0, %v994
      %v996 = vmul.f32 %v988, %v822
      %v997 = vmul.f32 %v982, %v989
      %v998 = vadd.f32 %v996, %v997
      %v999 = vtanh.pop %v998
      %v1000 = vmul.f32 %v995, %v999
      %1001 = vst [vmem:[#allocation4 + $0x10] sm:$0xff] %v1000
      %s1002 = scalar_lea.vmem %s374, 96
      %v1003 = vld [vmem:[%s1002] sm:$0xff]
      %v1004 = vld [vmem:[%s1002 + $0x8] sm:$0xff]
      %v1005 = vld [vmem:[%s1002 + $0x10] sm:$0xff]
      %v1006 = vld [vmem:[%s1002 + $0x18] sm:$0xff]
      %1007 = vmatprep.subr.mxu0 %v470
      %1008 = vmatpush1.msra.mxu0 %v469
      %1009 = vmatprep.subr.mxu0 %v466
      %1010 = vmatpush1.msra.mxu0 %v465
      %1011 = vmatprep.subr.mxu0 %v462
      %1012 = vmatpush1.msra.mxu0 %v461
      %1013 = vmatprep.subr.mxu0 %v458
      %1014 = vmatpush1.msra.mxu0 %v457
      %1015 = vmatprep.subr.mxu0 %v454
      %1016 = vmatpush1.msra.mxu0 %v453
      %1017 = vmatprep.subr.mxu0 %v450
      %1018 = vmatpush1.msra.mxu0 %v449
      %1019 = vmatprep.subr.mxu0 %v446
      %1020 = vmatpush1.msra.mxu0 %v445
      %1021 = vmatprep.subr.mxu0 %v442
      %1022 = vmatpush1.msra.mxu0 %v441
      %1023 = vmatprep.subr.mxu0 %v438
      %1024 = vmatpush1.msra.mxu0 %v437
      %1025 = vmatprep.subr.mxu0 %v434
      %1026 = vmatpush1.msra.mxu0 %v433
      %1027 = vmatprep.subr.mxu0 %v430
      %1028 = vmatpush1.msra.mxu0 %v429
      %1029 = vmatprep.subr.mxu0 %v426
      %1030 = vmatpush1.msra.mxu0 %v425
      %1031 = vmatprep.subr.mxu0 %v422
      %1032 = vmatpush1.msra.mxu0 %v421
      %1033 = vmatprep.subr.mxu0 %v418
      %1034 = vmatpush1.msra.mxu0 %v417
      %1035 = vmatprep.subr.mxu0 %v414
      %1036 = vmatpush1.msra.mxu0 %v413
      %1037 = vmatprep.subr.mxu0 %v410
      %1038 = vmatpush1.msra.mxu0 %v409
      %1039 = vmatprep.subr.mxu0 0.0
      %1040 = vmatpush2.msra.mxu0 0.0
      %1041 = vmatprep.subr.mxu0 0.0
      %1042 = vmatpush2.msra.mxu0 0.0
      %1043 = vmatprep.subr.mxu0 0.0
      %1044 = vmatpush2.msra.mxu0 0.0
      %1045 = vmatprep.subr.mxu0 0.0
      %1046 = vmatpush2.msra.mxu0 0.0
      %1047 = vmatprep.subr.mxu0 0.0
      %1048 = vmatpush2.msra.mxu0 0.0
      %1049 = vmatprep.subr.mxu0 0.0
      %1050 = vmatpush2.msra.mxu0 0.0
      %1051 = vmatprep.subr.mxu0 0.0
      %1052 = vmatpush2.msra.mxu0 0.0
      %1053 = vmatprep.subr.mxu0 0.0
      %1054 = vmatpush2.msra.mxu0 0.0
      %1055 = vmatprep.subr.mxu0 0.0
      %1056 = vmatpush2.msra.mxu0 0.0
      %1057 = vmatprep.subr.mxu0 0.0
      %1058 = vmatpush2.msra.mxu0 0.0
      %1059 = vmatprep.subr.mxu0 0.0
      %1060 = vmatpush2.msra.mxu0 0.0
      %1061 = vmatprep.subr.mxu0 0.0
      %1062 = vmatpush2.msra.mxu0 0.0
      %1063 = vmatprep.subr.mxu0 0.0
      %1064 = vmatpush2.msra.mxu0 0.0
      %1065 = vmatprep.subr.mxu0 0.0
      %1066 = vmatpush2.msra.mxu0 0.0
      %1067 = vmatprep.subr.mxu0 0.0
      %1068 = vmatpush2.msra.mxu0 0.0
      %1069 = vmatprep.subr.mxu0 0.0
      %1070 = vmatpush2.msra.mxu0 0.0
      %1071 = vmatprep.mubr.f32.mxu0 0.0
      %1072 = vmatmul.mubr.f32.gmra.mxu0 %v1000
      %v1073 = vpop.f32.mrf.mxu0
      %v1074 = vadd.f32 0.0, %v1073
      %v1075 = vpop.f32.mrf.mxu0
      %v1076 = vadd.f32 0.0, %v1075
      %1077 = vdwg.mxu0
      %1078 = vmatprep.subr.mxu0 %v472
      %1079 = vmatpush1.msra.mxu0 %v471
      %1080 = vmatprep.subr.mxu0 %v468
      %1081 = vmatpush1.msra.mxu0 %v467
      %1082 = vmatprep.subr.mxu0 %v464
      %1083 = vmatpush1.msra.mxu0 %v463
      %1084 = vmatprep.subr.mxu0 %v460
      %1085 = vmatpush1.msra.mxu0 %v459
      %1086 = vmatprep.subr.mxu0 %v456
      %1087 = vmatpush1.msra.mxu0 %v455
      %1088 = vmatprep.subr.mxu0 %v452
      %1089 = vmatpush1.msra.mxu0 %v451
      %1090 = vmatprep.subr.mxu0 %v448
      %1091 = vmatpush1.msra.mxu0 %v447
      %1092 = vmatprep.subr.mxu0 %v444
      %1093 = vmatpush1.msra.mxu0 %v443
      %1094 = vmatprep.subr.mxu0 %v440
      %1095 = vmatpush1.msra.mxu0 %v439
      %1096 = vmatprep.subr.mxu0 %v436
      %1097 = vmatpush1.msra.mxu0 %v435
      %1098 = vmatprep.subr.mxu0 %v432
      %1099 = vmatpush1.msra.mxu0 %v431
      %1100 = vmatprep.subr.mxu0 %v428
      %1101 = vmatpush1.msra.mxu0 %v427
      %1102 = vmatprep.subr.mxu0 %v424
      %1103 = vmatpush1.msra.mxu0 %v423
      %1104 = vmatprep.subr.mxu0 %v420
      %1105 = vmatpush1.msra.mxu0 %v419
      %1106 = vmatprep.subr.mxu0 %v416
      %1107 = vmatpush1.msra.mxu0 %v415
      %1108 = vmatprep.subr.mxu0 %v412
      %1109 = vmatpush1.msra.mxu0 %v411
      %1110 = vmatprep.subr.mxu0 0.0
      %1111 = vmatpush2.msra.mxu0 0.0
      %1112 = vmatprep.subr.mxu0 0.0
      %1113 = vmatpush2.msra.mxu0 0.0
      %1114 = vmatprep.subr.mxu0 0.0
      %1115 = vmatpush2.msra.mxu0 0.0
      %1116 = vmatprep.subr.mxu0 0.0
      %1117 = vmatpush2.msra.mxu0 0.0
      %1118 = vmatprep.subr.mxu0 0.0
      %1119 = vmatpush2.msra.mxu0 0.0
      %1120 = vmatprep.subr.mxu0 0.0
      %1121 = vmatpush2.msra.mxu0 0.0
      %1122 = vmatprep.subr.mxu0 0.0
      %1123 = vmatpush2.msra.mxu0 0.0
      %1124 = vmatprep.subr.mxu0 0.0
      %1125 = vmatpush2.msra.mxu0 0.0
      %1126 = vmatprep.subr.mxu0 0.0
      %1127 = vmatpush2.msra.mxu0 0.0
      %1128 = vmatprep.subr.mxu0 0.0
      %1129 = vmatpush2.msra.mxu0 0.0
      %1130 = vmatprep.subr.mxu0 0.0
      %1131 = vmatpush2.msra.mxu0 0.0
      %1132 = vmatprep.subr.mxu0 0.0
      %1133 = vmatpush2.msra.mxu0 0.0
      %1134 = vmatprep.subr.mxu0 0.0
      %1135 = vmatpush2.msra.mxu0 0.0
      %1136 = vmatprep.subr.mxu0 0.0
      %1137 = vmatpush2.msra.mxu0 0.0
      %1138 = vmatprep.subr.mxu0 0.0
      %1139 = vmatpush2.msra.mxu0 0.0
      %1140 = vmatprep.subr.mxu0 0.0
      %1141 = vmatpush2.msra.mxu0 0.0
      %1142 = vmatprep.mubr.f32.mxu0 0.0
      %1143 = vmatmul.mubr.f32.gmra.mxu0 %v1000
      %v1144 = vpop.f32.mrf.mxu0
      %v1145 = vadd.f32 0.0, %v1144
      %v1146 = vpop.f32.mrf.mxu0
      %v1147 = vadd.f32 0.0, %v1146
      %1148 = vdwg.mxu0
      %v1149 = vadd.f32 %v1003, %v1074
      %v1150 = vadd.f32 %v1004, %v1076
      %v1151 = vadd.f32 %v1005, %v1145
      %v1152 = vadd.f32 %v1006, %v1147
      %v1153 = vxor.u32 %v1149, 2147483648
      %v1154 = vmul.f32 %v1153, 1.442695
      %v1155 = vpow.pop %v1154
      %v1156 = vadd.f32 %v1155, 1.0
      %v1157 = vrcp.pop %v1156
      %v1158 = vmul.f32 1.0, %v1157
      %v1159 = vxor.u32 %v1150, 2147483648
      %v1160 = vmul.f32 %v1159, 1.442695
      %v1161 = vpow.pop %v1160
      %v1162 = vadd.f32 %v1161, 1.0
      %v1163 = vrcp.pop %v1162
      %v1164 = vmul.f32 1.0, %v1163
      %v1165 = vtanh.pop %v1151
      %v1166 = vxor.u32 %v1152, 2147483648
      %v1167 = vmul.f32 %v1166, 1.442695
      %v1168 = vpow.pop %v1167
      %v1169 = vadd.f32 %v1168, 1.0
      %v1170 = vrcp.pop %v1169
      %v1171 = vmul.f32 1.0, %v1170
      %v1172 = vmul.f32 %v1164, %v998
      %v1173 = vmul.f32 %v1158, %v1165
      %v1174 = vadd.f32 %v1172, %v1173
      %v1175 = vtanh.pop %v1174
      %v1176 = vmul.f32 %v1171, %v1175
      %1177 = vst [vmem:[#allocation4 + $0x18] sm:$0xff] %v1176
      %1178 = vst [vmem:[#allocation2] sm:$0xff] %v1176
      %1179 = vst [vmem:[#allocation3] sm:$0xff] %v1174
      %v1180 = vld [vmem:[#allocation4] sm:$0xff]
      %v1181 = vld [vmem:[#allocation4 + $0x8] sm:$0xff]
      %v1182 = vld [vmem:[#allocation4 + $0x10] sm:$0xff]
      %v1183 = vld [vmem:[#allocation4 + $0x18] sm:$0xff]
      %v1184 = vld [vmem:[%s2] sm:$0xff]
      %v1185 = vld [vmem:[%s2 + $0x8] sm:$0xff]
      %v1186 = vld [vmem:[%s2 + $0x10] sm:$0xff]
      %v1187 = vld [vmem:[%s2 + $0x18] sm:$0xff]
      %v1188 = vld [vmem:[%s2 + $0x20] sm:$0xff]
      %v1189 = vld [vmem:[%s2 + $0x28] sm:$0xff]
      %v1190 = vld [vmem:[%s2 + $0x30] sm:$0xff]
      %v1191 = vld [vmem:[%s2 + $0x38] sm:$0xff]
      %v1192 = vld [vmem:[%s2 + $0x40] sm:$0xff]
      %v1193 = vld [vmem:[%s2 + $0x48] sm:$0xff]
      %v1194 = vld [vmem:[%s2 + $0x50] sm:$0xff]
      %v1195 = vld [vmem:[%s2 + $0x58] sm:$0xff]
      %v1196 = vld [vmem:[%s2 + $0x60] sm:$0xff]
      %v1197 = vld [vmem:[%s2 + $0x68] sm:$0xff]
      %v1198 = vld [vmem:[%s2 + $0x70] sm:$0xff]
      %v1199 = vld [vmem:[%s2 + $0x78] sm:$0xff]
      %v1200 = vld [vmem:[%s3] sm:$0x1]
      %v1202 = vlaneseq
      %v1203 = vshrl.u32 %v1202, 7
      %v1204 = vsub.s32 0, %v1203
      %v1205 = vrot.slane %v1200, %v1204
      %1207 = vmatprep.subr.mxu0 0.0
      %1208 = vmatpush1.msra.mxu0 %v1199
      %1209 = vmatprep.subr.mxu0 0.0
      %1210 = vmatpush1.msra.mxu0 %v1198
      %1211 = vmatprep.subr.mxu0 0.0
      %1212 = vmatpush1.msra.mxu0 %v1197
      %1213 = vmatprep.subr.mxu0 0.0
      %1214 = vmatpush1.msra.mxu0 %v1196
      %1215 = vmatprep.subr.mxu0 0.0
      %1216 = vmatpush1.msra.mxu0 %v1195
      %1217 = vmatprep.subr.mxu0 0.0
      %1218 = vmatpush1.msra.mxu0 %v1194
      %1219 = vmatprep.subr.mxu0 0.0
      %1220 = vmatpush1.msra.mxu0 %v1193
      %1221 = vmatprep.subr.mxu0 0.0
      %1222 = vmatpush1.msra.mxu0 %v1192
      %1223 = vmatprep.subr.mxu0 0.0
      %1224 = vmatpush1.msra.mxu0 %v1191
      %1225 = vmatprep.subr.mxu0 0.0
      %1226 = vmatpush1.msra.mxu0 %v1190
      %1227 = vmatprep.subr.mxu0 0.0
      %1228 = vmatpush1.msra.mxu0 %v1189
      %1229 = vmatprep.subr.mxu0 0.0
      %1230 = vmatpush1.msra.mxu0 %v1188
      %1231 = vmatprep.subr.mxu0 0.0
      %1232 = vmatpush1.msra.mxu0 %v1187
      %1233 = vmatprep.subr.mxu0 0.0
      %1234 = vmatpush1.msra.mxu0 %v1186
      %1235 = vmatprep.subr.mxu0 0.0
      %1236 = vmatpush1.msra.mxu0 %v1185
      %1237 = vmatprep.subr.mxu0 0.0
      %1238 = vmatpush1.msra.mxu0 %v1184
      %1239 = vmatprep.subr.mxu0 0.0
      %1240 = vmatpush2.msra.mxu0 0.0
      %1241 = vmatprep.subr.mxu0 0.0
      %1242 = vmatpush2.msra.mxu0 0.0
      %1243 = vmatprep.subr.mxu0 0.0
      %1244 = vmatpush2.msra.mxu0 0.0
      %1245 = vmatprep.subr.mxu0 0.0
      %1246 = vmatpush2.msra.mxu0 0.0
      %1247 = vmatprep.subr.mxu0 0.0
      %1248 = vmatpush2.msra.mxu0 0.0
      %1249 = vmatprep.subr.mxu0 0.0
      %1250 = vmatpush2.msra.mxu0 0.0
      %1251 = vmatprep.subr.mxu0 0.0
      %1252 = vmatpush2.msra.mxu0 0.0
      %1253 = vmatprep.subr.mxu0 0.0
      %1254 = vmatpush2.msra.mxu0 0.0
      %1255 = vmatprep.subr.mxu0 0.0
      %1256 = vmatpush2.msra.mxu0 0.0
      %1257 = vmatprep.subr.mxu0 0.0
      %1258 = vmatpush2.msra.mxu0 0.0
      %1259 = vmatprep.subr.mxu0 0.0
      %1260 = vmatpush2.msra.mxu0 0.0
      %1261 = vmatprep.subr.mxu0 0.0
      %1262 = vmatpush2.msra.mxu0 0.0
      %1263 = vmatprep.subr.mxu0 0.0
      %1264 = vmatpush2.msra.mxu0 0.0
      %1265 = vmatprep.subr.mxu0 0.0
      %1266 = vmatpush2.msra.mxu0 0.0
      %1267 = vmatprep.subr.mxu0 0.0
      %1268 = vmatpush2.msra.mxu0 0.0
      %1269 = vmatprep.subr.mxu0 0.0
      %1270 = vmatpush2.msra.mxu0 0.0
      %1271 = vmatprep.mubr.f32.mxu0 0.0
      %1272 = vmatmul.mubr.f32.gmra.mxu0 %v1180
      %v1273 = vpop.f32.mrf.mxu0
      %v1274 = vadd.f32 %v1205, %v1273
      %v1275 = vpop.f32.mrf.mxu0
      %1276 = vmatprep.mubr.f32.mxu0 0.0
      %1277 = vmatmul.mubr.f32.gmra.mxu0 %v1181
      %v1278 = vpop.f32.mrf.mxu0
      %v1279 = vadd.f32 %v1205, %v1278
      %v1280 = vpop.f32.mrf.mxu0
      %1281 = vmatprep.mubr.f32.mxu0 0.0
      %1282 = vmatmul.mubr.f32.gmra.mxu0 %v1182
      %v1283 = vpop.f32.mrf.mxu0
      %v1284 = vadd.f32 %v1205, %v1283
      %v1285 = vpop.f32.mrf.mxu0
      %1286 = vmatprep.mubr.f32.mxu0 0.0
      %1287 = vmatmul.mubr.f32.gmra.mxu0 %v1183
      %v1288 = vpop.f32.mrf.mxu0
      %v1289 = vadd.f32 %v1205, %v1288
      %v1290 = vpop.f32.mrf.mxu0
      %1291 = vdwg.mxu0
      %1292 = vst [vmem:[%s391] sm:$0xff] %v1274
      %s1293 = scalar_lea.vmem %s391, 8
      %1294 = vst [vmem:[%s1293] sm:$0xff] %v1279
      %s1295 = scalar_lea.vmem %s391, 16
      %1296 = vst [vmem:[%s1295] sm:$0xff] %v1284
      %s1297 = scalar_lea.vmem %s391, 24
      %1298 = vst [vmem:[%s1297] sm:$0xff] %v1289
      %p1299 = scmp.eq.s32.totalorder %s25, 1
      // Predicated region
      $region49: #{charseq_rnn_forward.1} parent=43 // pred_check
        %p1300 = pneg %p1299
      $region50: #{charseq_rnn_forward.1} parent=43 // pred_check_branch
        %1302 = sbr.rel (%p1300) target = $region52
      $region51: #{charseq_rnn_forward.1} parent=43 // pred_region
        %1303 = vst [vmem:[%s396] sm:$0xff] %v1176
        %1304 = vst [vmem:[%s400] sm:$0xff] %v1174
      $region52: #{charseq_rnn_forward.1} parent=43 // pred_fallthru
        _
      %s1305 = smul.u32 4, %s25
      %p1306 = scmp.lt.s32.totalorder %s1305, 7
      %s1307 = scalar_select %p1306, %s1305, 7
      %p1308 = scmp.lt.s32.totalorder %s24, 0
      %s1309 = scalar_select %p1308, %s24, 0
      %s1310 = sadd.s32 %s1309, %s1307
      %s1311 = smul.addr %s1310, 8
      %s1312 = scalar_lea.vmem %s6, %s1311
      %p1313 = scmp.lt.s32.totalorder %s24, 0
      %s1314 = scalar_select %p1313, %s24, 0
      %s1315 = smul.addr %s1314, 8
      %s1316 = scalar_lea.vmem %s7, %s1315
      %p1317 = scmp.lt.s32.totalorder %s24, 0
      %s1318 = scalar_select %p1317, %s24, 0
      %s1319 = smul.addr %s1318, 8
      %s1320 = scalar_lea.vmem %s8, %s1319
      // Predicated region
      $region53: #{charseq_rnn_forward.1} parent=43 // pred_check
        %p1321 = pneg %p195
      $region54: #{charseq_rnn_forward.1} parent=43 // pred_check_branch
        %1323 = sbr.rel (%p1321) target = $region56
      $region55: #{charseq_rnn_forward.1} parent=43 // pred_region
        %s1324 = smul.u32 4, %s25
      $region56: #{charseq_rnn_forward.1} parent=43 // pred_fallthru
        _
      // Predicated region
      $region57: #{charseq_rnn_forward.1} parent=43 // pred_check
        %p1325 = pneg %p221
      $region58: #{charseq_rnn_forward.1} parent=43 // pred_check_branch
        %1327 = sbr.rel (%p1325) target = $region60
      $region59: #{charseq_rnn_forward.1} parent=43 // pred_region
        _
      $region60: #{charseq_rnn_forward.1} parent=43 // pred_fallthru
        _
      // Predicated region
      $region61: #{charseq_rnn_forward.1} parent=43 // pred_check
        %p1328 = pneg %p247
      $region62: #{charseq_rnn_forward.1} parent=43 // pred_check_branch
        %1330 = sbr.rel (%p1328) target = $region64
      $region63: #{charseq_rnn_forward.1} parent=43 // pred_region
        _
      $region64: #{charseq_rnn_forward.1} parent=43 // pred_fallthru
        _
      // Predicated region
      $region65: #{charseq_rnn_forward.1} parent=43 // pred_check
        %p1331 = pneg %p221
      $region66: #{charseq_rnn_forward.1} parent=43 // pred_check_branch
        %1333 = sbr.rel (%p1331) target = $region68
      $region67: #{charseq_rnn_forward.1} parent=43 // pred_region
        %p1334 = scmp.lt.s32.totalorder %s24, 0
        %s1335 = scalar_select %p1334, %s24, 0
        %s1336 = smul.addr %s1335, 8
        %s1337 = scalar_lea.vmem %s7, %s1336
      $region68: #{charseq_rnn_forward.1} parent=43 // pred_fallthru
        _
      // Predicated region
      $region69: #{charseq_rnn_forward.1} parent=43 // pred_check
        %p1338 = pneg %p247
      $region70: #{charseq_rnn_forward.1} parent=43 // pred_check_branch
        %1340 = sbr.rel (%p1338) target = $region72
      $region71: #{charseq_rnn_forward.1} parent=43 // pred_region
        %p1341 = scmp.lt.s32.totalorder %s24, 0
        %s1342 = scalar_select %p1341, %s24, 0
        %s1343 = smul.addr %s1342, 8
        %s1344 = scalar_lea.vmem %s8, %s1343
      $region72: #{charseq_rnn_forward.1} parent=43 // pred_fallthru
        _
    $region44: #{charseq_rnn_forward.1} parent=5 // pred_fallthru
      _
    %p1345 = scmp.le.s32.totalorder 2, %s15
    // Predicated region
    $region73: #{charseq_rnn_forward.1} parent=5 // pred_check
      %p1346 = pneg %p1345
    $region74: #{charseq_rnn_forward.1} parent=5 // pred_check_branch
      %1348 = sbr.rel (%p1346) target = $region76
    $region75: #{charseq_rnn_forward.1} parent=5 // pred_region
      %s1349 = ssub.s32 %s15, 2
      // Predicated region
      $region77: #{charseq_rnn_forward.1} parent=75 // pred_check
        %p1350 = pneg %p201
      $region78: #{charseq_rnn_forward.1} parent=75 // pred_check_branch
        %1352 = sbr.rel (%p1350) target = $region80
      $region79: #{charseq_rnn_forward.1} parent=75 // pred_region
        %s1353 = smul.u32 4, %s27
        %p1354 = scmp.lt.s32.totalorder %s1353, 7
        %s1355 = scalar_select %p1354, %s1353, 7
        %p1356 = scmp.lt.s32.totalorder %s26, 0
        %s1357 = scalar_select %p1356, %s26, 0
        %s1358 = sadd.s32 %s1357, %s1355
        %s1359 = smul.addr %s1358, 8
        %s1360 = scalar_lea.vmem %s6, %s1359
      $region80: #{charseq_rnn_forward.1} parent=75 // pred_fallthru
        _
    $region76: #{charseq_rnn_forward.1} parent=5 // pred_fallthru
      _
  $region6: #{charseq_rnn_forward.1} parent=0 // loop_footer
    %s19 = sadd.s32 1, %s15
  $region7: #{charseq_rnn_forward.1} parent=0 // loop_footer_branch
    %14 = sbr.rel target = $region3
  $region8: #{charseq_rnn_forward.1} parent=0 // loop_exit
    _

</llo_original>
